<compile_context>
chip_gen: v7x
topology: tpu7x:2x2x1
jax: 0.10.0
libtpu: 0.0.40
codegen_flags: <defaults>
</compile_context>

<pallas_src>
import jax
import jax.numpy as jnp
from jax.experimental import pallas as pl
from jax.experimental.pallas import tpu as pltpu


# ---------------------------------------------------------------------------
# Tuning constants / tile pickers
# ---------------------------------------------------------------------------
_MXU_MIN_V = 33                     # V > 32 -> MXU matmul path
_VMEM_BUDGET = 24 * 1024 * 1024     # target for double-buffered block working set
_VMEM_LIMIT = 32 * 1024 * 1024      # scoped VMEM limit handed to Mosaic
_ACC_BUDGET = 128 * 1024            # keep the f32 accumulator <= ~32 vregs


def _pick_tw(W):
    """W tile: full W when small, else largest small power-of-two divisor."""
    if W <= 128:
        return W
    for tw in (128, 64, 32, 16, 8):
        if W % tw == 0:
            return tw
    return W  # ragged W: single full-W block (always a legal block dim)


def _pick_tl_vpu(L, C, V, tw, itemsize):
    """Time tile for the VPU path: a multiple of 128 (lane-tiling rule) chosen
    under the VMEM + accumulator budgets, or full L when L % 128 != 0."""
    if L % 128 != 0:
        return L
    per_l = 2 * itemsize * (V * C + V * tw + C * tw)   # double-buffered in/out
    cap = min(_VMEM_BUDGET // max(per_l, 1),
              _ACC_BUDGET // max(4 * C * tw, 1),
              512, L)
    best = 128
    m = 256
    while m <= cap:
        if L % m == 0:
            best = m
        m += 128
    return best


def _pick_tl_mxu(L, C, V, W, itemsize):
    """Time tile for the MXU path: any divisor of L (time is a leading,
    untiled block dim) under the VMEM budget, capped at 128 timesteps."""
    per_l = 2 * itemsize * (C * V + V * W + C * W)
    cap = max(1, min(_VMEM_BUDGET // max(per_l, 1), 128, L))
    for tl in range(cap, 0, -1):
        if L % tl == 0:
            return tl
    return 1


# ---------------------------------------------------------------------------
# Kernels
# ---------------------------------------------------------------------------
def _dy_nconv_vpu_kernel(x_ref, a_ref, o_ref):
    # x_ref: (1, V, C, TL)   a_ref: (1, V, TW, TL)   o_ref: (1, C, TW, TL)
    _, V, C, TL = x_ref.shape
    TW = a_ref.shape[2]

    acc = jnp.zeros((C, TW, TL), jnp.float32)

    # V <= 32 on this path (larger V routes to the MXU kernel), so a fully
    # unrolled static loop is fine; the v-slices are free leading-dim views.
    # TODO(synk): switch the W-broadcast of x to a stride-0 sublane-broadcast
    # load (pl.ds(v, TW, stride=0)) so it comes out of the vld slots.
    for v in range(V):
        xv = x_ref[0, v].astype(jnp.float32)        # (C, TL)  free view
        av = a_ref[0, v].astype(jnp.float32)        # (TW, TL) free view
        acc = acc + xv[:, None, :] * av[None, :, :]  # (C, TW, TL)

    o_ref[0] = acc.astype(o_ref.dtype)


def _dy_nconv_mxu_kernel(x_ref, a_ref, o_ref):
    # x_ref: (1, TL, C, V)   a_ref: (1, TL, V, W)   o_ref: (1, TL, C, W)
    out = jnp.einsum('lcv,lvw->lcw', x_ref[0], a_ref[0],
                     preferred_element_type=jnp.float32)
    o_ref[0] = out.astype(o_ref.dtype)


# ---------------------------------------------------------------------------
# Wrappers
# ---------------------------------------------------------------------------
def _dy_nconv_vpu(x, A, out_dtype):
    N, C, V, L = x.shape
    W = A.shape[2]
    itemsize = jnp.dtype(x.dtype).itemsize
    tw = _pick_tw(W)
    tl = _pick_tl_vpu(L, C, V, tw, itemsize)

    xt = jnp.transpose(x, (0, 2, 1, 3))             # (N, V, C, L)
    grid = (N, L // tl, W // tw)                    # W innermost: x stays resident

    # TODO(synk): for short-L + wide-W configs a W-on-lanes layout would make the
    # output lane-dense; not needed here since wide-W routes to the MXU path.
    return pl.pallas_call(
        _dy_nconv_vpu_kernel,
        out_shape=jax.ShapeDtypeStruct((N, C, W, L), out_dtype),
        grid=grid,
        in_specs=[
            pl.BlockSpec((1, V, C, tl), lambda n, t, w: (n, 0, 0, t)),
            pl.BlockSpec((1, V, tw, tl), lambda n, t, w: (n, 0, w, t)),
        ],
        out_specs=pl.BlockSpec((1, C, tw, tl), lambda n, t, w: (n, 0, w, t)),
        compiler_params=pltpu.CompilerParams(
            dimension_semantics=("parallel", "parallel", "parallel"),
            vmem_limit_bytes=_VMEM_LIMIT),
    )(xt, A)


def _dy_nconv_mxu(x, A, out_dtype):
    N, C, V, L = x.shape
    W = A.shape[2]
    itemsize = jnp.dtype(x.dtype).itemsize
    tl = _pick_tl_mxu(L, C, V, W, itemsize)
    # Keep both v7x TensorCores busy even for tiny (N, L) grids.
    while N * (L // tl) < 2 and tl % 2 == 0:
        tl //= 2

    xt = jnp.transpose(x, (0, 3, 1, 2))             # (N, L, C, V): V on lanes
    at = jnp.transpose(A, (0, 3, 1, 2))             # (N, L, V, W): W on lanes

    out_t = pl.pallas_call(
        _dy_nconv_mxu_kernel,
        out_shape=jax.ShapeDtypeStruct((N, L, C, W), out_dtype),
        grid=(N, L // tl),
        in_specs=[
            pl.BlockSpec((1, tl, C, V), lambda n, t: (n, t, 0, 0)),
            pl.BlockSpec((1, tl, V, W), lambda n, t: (n, t, 0, 0)),
        ],
        out_specs=pl.BlockSpec((1, tl, C, W), lambda n, t: (n, t, 0, 0)),
        compiler_params=pltpu.CompilerParams(
            dimension_semantics=("parallel", "parallel"),
            vmem_limit_bytes=_VMEM_LIMIT),
    )(xt, at)
    return jnp.transpose(out_t, (0, 2, 3, 1))       # -> (N, C, W, L)


def dy_nconv_pallas(x, A):
    """x: (N, C, V, L), A: (N, V, W, L)  ->  (N, C, W, L)."""
    N, C, V, L = x.shape
    Na, Va, W, La = A.shape
    assert (Na, Va, La) == (N, V, L), (x.shape, A.shape)
    out_dtype = jnp.result_type(x.dtype, A.dtype)
    if V >= _MXU_MIN_V:
        return _dy_nconv_mxu(x, A, out_dtype)
    return _dy_nconv_vpu(x, A, out_dtype)


# ---------------------------------------------------------------------------
# Pure-JAX reference (mirrors the PyTorch forward)
# ---------------------------------------------------------------------------
def dy_nconv_ref(x, A):
    return jnp.einsum('ncvl,nvwl->ncwl', x, A)


# ---------------------------------------------------------------------------
if __name__ == "__main__":
    key = jax.random.PRNGKey(0)
    ks = jax.random.split(key, 6)

    def check(x, A, rtol, atol):
        out = jax.block_until_ready(dy_nconv_pallas(x, A))
        ref = dy_nconv_ref(x, A)
        assert out.shape == ref.shape, (out.shape, ref.shape)
        err = float(jnp.max(jnp.abs(out - ref)))
        assert jnp.allclose(out, ref, rtol=rtol, atol=atol), err

    # 1) Tiny-V, short-L config (VPU broadcast-MAC path, full-L blocks).
    N, C, V, L = 2, 4, 16, 16
    x = jax.random.normal(ks[0], (N, C, V, L), dtype=jnp.float32)
    A = jax.nn.softmax(jax.random.normal(ks[1], (N, V, V, L), dtype=jnp.float32), axis=2)
    check(x, A, 1e-5, 1e-5)

    # 2) Tiny-V, lane-dense L=128 config (VPU path, 128-wide time blocks).
    N, C, V, L = 2, 4, 16, 128
    x = jax.random.normal(ks[2], (N, C, V, L), dtype=jnp.float32)
    A = jax.nn.softmax(jax.random.normal(ks[3], (N, V, V, L), dtype=jnp.float32), axis=2)
    check(x, A, 1e-5, 1e-5)

    # 3) Larger node count (MXU matmul path).  Tolerance is loose enough to
    #    cover MXU f32 pass rounding vs. the XLA einsum reference.
    N, C, V, L = 2, 8, 128, 16
    x = jax.random.normal(ks[4], (N, C, V, L), dtype=jnp.float32)
    A = jax.nn.softmax(jax.random.normal(ks[5], (N, V, V, L), dtype=jnp.float32), axis=2)
    check(x, A, 2e-2, 2e-2)

    print("KERNEL_OK")
</pallas_src>

<mosaic_0001>
module attributes {stable_mosaic.version = 11 : i64} {
  func.func @_dy_nconv_vpu_kernel(%arg0: i32, %arg1: i32, %arg2: i32, %arg3: memref<1x16x4x16xf32, #tpu.memory_space<vmem>>, %arg4: memref<1x16x16x16xf32, #tpu.memory_space<vmem>>, %arg5: memref<1x4x16x16xf32, #tpu.memory_space<vmem>>) attributes {dimension_semantics = [#tpu.dimension_semantics<parallel>, #tpu.dimension_semantics<parallel>, #tpu.dimension_semantics<parallel>], iteration_bounds = array<i64: 2, 1, 1>, scalar_prefetch = 0 : i64, scratch_operands = 0 : i64, tpu.core_type = #tpu.core_type<tc>, window_params = [{transform_indices = @transform_0, window_bounds = array<i64: 1, 16, 4, 16>}, {transform_indices = @transform_1, window_bounds = array<i64: 1, 16, 16, 16>}, {transform_indices = @transform_2, window_bounds = array<i64: 1, 4, 16, 16>}]} {
    %cst = arith.constant 0.000000e+00 : f32
    %0 = vector.broadcast %cst : f32 to vector<4x16x16xf32>
    %c0 = arith.constant 0 : index
    %c0_0 = arith.constant 0 : index
    %c0_1 = arith.constant 0 : index
    %c0_2 = arith.constant 0 : index
    %1 = vector.load %arg3[%c0, %c0_0, %c0_1, %c0_2] : memref<1x16x4x16xf32, #tpu.memory_space<vmem>>, vector<1x1x4x16xf32>
    %2 = vector.shape_cast %1 : vector<1x1x4x16xf32> to vector<4x16xf32>
    %c0_3 = arith.constant 0 : index
    %c0_4 = arith.constant 0 : index
    %c0_5 = arith.constant 0 : index
    %c0_6 = arith.constant 0 : index
    %3 = vector.load %arg4[%c0_3, %c0_4, %c0_5, %c0_6] : memref<1x16x16x16xf32, #tpu.memory_space<vmem>>, vector<1x1x16x16xf32>
    %4 = vector.shape_cast %3 : vector<1x1x16x16xf32> to vector<16x16xf32>
    %5 = vector.shape_cast %2 : vector<4x16xf32> to vector<4x1x16xf32>
    %6 = vector.shape_cast %4 : vector<16x16xf32> to vector<1x16x16xf32>
    %7 = vector.broadcast %5 : vector<4x1x16xf32> to vector<4x16x16xf32>
    %8 = vector.broadcast %6 : vector<1x16x16xf32> to vector<4x16x16xf32>
    %9 = arith.mulf %7, %8 : vector<4x16x16xf32>
    %10 = arith.addf %0, %9 : vector<4x16x16xf32>
    %c0_7 = arith.constant 0 : index
    %c1 = arith.constant 1 : index
    %c0_8 = arith.constant 0 : index
    %c0_9 = arith.constant 0 : index
    %11 = vector.load %arg3[%c0_7, %c1, %c0_8, %c0_9] : memref<1x16x4x16xf32, #tpu.memory_space<vmem>>, vector<1x1x4x16xf32>
    %12 = vector.shape_cast %11 : vector<1x1x4x16xf32> to vector<4x16xf32>
    %c0_10 = arith.constant 0 : index
    %c1_11 = arith.constant 1 : index
    %c0_12 = arith.constant 0 : index
    %c0_13 = arith.constant 0 : index
    %13 = vector.load %arg4[%c0_10, %c1_11, %c0_12, %c0_13] : memref<1x16x16x16xf32, #tpu.memory_space<vmem>>, vector<1x1x16x16xf32>
    %14 = vector.shape_cast %13 : vector<1x1x16x16xf32> to vector<16x16xf32>
    %15 = vector.shape_cast %12 : vector<4x16xf32> to vector<4x1x16xf32>
    %16 = vector.shape_cast %14 : vector<16x16xf32> to vector<1x16x16xf32>
    %17 = vector.broadcast %15 : vector<4x1x16xf32> to vector<4x16x16xf32>
    %18 = vector.broadcast %16 : vector<1x16x16xf32> to vector<4x16x16xf32>
    %19 = arith.mulf %17, %18 : vector<4x16x16xf32>
    %20 = arith.addf %10, %19 : vector<4x16x16xf32>
    %c0_14 = arith.constant 0 : index
    %c2 = arith.constant 2 : index
    %c0_15 = arith.constant 0 : index
    %c0_16 = arith.constant 0 : index
    %21 = vector.load %arg3[%c0_14, %c2, %c0_15, %c0_16] : memref<1x16x4x16xf32, #tpu.memory_space<vmem>>, vector<1x1x4x16xf32>
    %22 = vector.shape_cast %21 : vector<1x1x4x16xf32> to vector<4x16xf32>
    %c0_17 = arith.constant 0 : index
    %c2_18 = arith.constant 2 : index
    %c0_19 = arith.constant 0 : index
    %c0_20 = arith.constant 0 : index
    %23 = vector.load %arg4[%c0_17, %c2_18, %c0_19, %c0_20] : memref<1x16x16x16xf32, #tpu.memory_space<vmem>>, vector<1x1x16x16xf32>
    %24 = vector.shape_cast %23 : vector<1x1x16x16xf32> to vector<16x16xf32>
    %25 = vector.shape_cast %22 : vector<4x16xf32> to vector<4x1x16xf32>
    %26 = vector.shape_cast %24 : vector<16x16xf32> to vector<1x16x16xf32>
    %27 = vector.broadcast %25 : vector<4x1x16xf32> to vector<4x16x16xf32>
    %28 = vector.broadcast %26 : vector<1x16x16xf32> to vector<4x16x16xf32>
    %29 = arith.mulf %27, %28 : vector<4x16x16xf32>
    %30 = arith.addf %20, %29 : vector<4x16x16xf32>
    %c0_21 = arith.constant 0 : index
    %c3 = arith.constant 3 : index
    %c0_22 = arith.constant 0 : index
    %c0_23 = arith.constant 0 : index
    %31 = vector.load %arg3[%c0_21, %c3, %c0_22, %c0_23] : memref<1x16x4x16xf32, #tpu.memory_space<vmem>>, vector<1x1x4x16xf32>
    %32 = vector.shape_cast %31 : vector<1x1x4x16xf32> to vector<4x16xf32>
    %c0_24 = arith.constant 0 : index
    %c3_25 = arith.constant 3 : index
    %c0_26 = arith.constant 0 : index
    %c0_27 = arith.constant 0 : index
    %33 = vector.load %arg4[%c0_24, %c3_25, %c0_26, %c0_27] : memref<1x16x16x16xf32, #tpu.memory_space<vmem>>, vector<1x1x16x16xf32>
    %34 = vector.shape_cast %33 : vector<1x1x16x16xf32> to vector<16x16xf32>
    %35 = vector.shape_cast %32 : vector<4x16xf32> to vector<4x1x16xf32>
    %36 = vector.shape_cast %34 : vector<16x16xf32> to vector<1x16x16xf32>
    %37 = vector.broadcast %35 : vector<4x1x16xf32> to vector<4x16x16xf32>
    %38 = vector.broadcast %36 : vector<1x16x16xf32> to vector<4x16x16xf32>
    %39 = arith.mulf %37, %38 : vector<4x16x16xf32>
    %40 = arith.addf %30, %39 : vector<4x16x16xf32>
    %c0_28 = arith.constant 0 : index
    %c4 = arith.constant 4 : index
    %c0_29 = arith.constant 0 : index
    %c0_30 = arith.constant 0 : index
    %41 = vector.load %arg3[%c0_28, %c4, %c0_29, %c0_30] : memref<1x16x4x16xf32, #tpu.memory_space<vmem>>, vector<1x1x4x16xf32>
    %42 = vector.shape_cast %41 : vector<1x1x4x16xf32> to vector<4x16xf32>
    %c0_31 = arith.constant 0 : index
    %c4_32 = arith.constant 4 : index
    %c0_33 = arith.constant 0 : index
    %c0_34 = arith.constant 0 : index
    %43 = vector.load %arg4[%c0_31, %c4_32, %c0_33, %c0_34] : memref<1x16x16x16xf32, #tpu.memory_space<vmem>>, vector<1x1x16x16xf32>
    %44 = vector.shape_cast %43 : vector<1x1x16x16xf32> to vector<16x16xf32>
    %45 = vector.shape_cast %42 : vector<4x16xf32> to vector<4x1x16xf32>
    %46 = vector.shape_cast %44 : vector<16x16xf32> to vector<1x16x16xf32>
    %47 = vector.broadcast %45 : vector<4x1x16xf32> to vector<4x16x16xf32>
    %48 = vector.broadcast %46 : vector<1x16x16xf32> to vector<4x16x16xf32>
    %49 = arith.mulf %47, %48 : vector<4x16x16xf32>
    %50 = arith.addf %40, %49 : vector<4x16x16xf32>
    %c0_35 = arith.constant 0 : index
    %c5 = arith.constant 5 : index
    %c0_36 = arith.constant 0 : index
    %c0_37 = arith.constant 0 : index
    %51 = vector.load %arg3[%c0_35, %c5, %c0_36, %c0_37] : memref<1x16x4x16xf32, #tpu.memory_space<vmem>>, vector<1x1x4x16xf32>
    %52 = vector.shape_cast %51 : vector<1x1x4x16xf32> to vector<4x16xf32>
    %c0_38 = arith.constant 0 : index
    %c5_39 = arith.constant 5 : index
    %c0_40 = arith.constant 0 : index
    %c0_41 = arith.constant 0 : index
    %53 = vector.load %arg4[%c0_38, %c5_39, %c0_40, %c0_41] : memref<1x16x16x16xf32, #tpu.memory_space<vmem>>, vector<1x1x16x16xf32>
    %54 = vector.shape_cast %53 : vector<1x1x16x16xf32> to vector<16x16xf32>
    %55 = vector.shape_cast %52 : vector<4x16xf32> to vector<4x1x16xf32>
    %56 = vector.shape_cast %54 : vector<16x16xf32> to vector<1x16x16xf32>
    %57 = vector.broadcast %55 : vector<4x1x16xf32> to vector<4x16x16xf32>
    %58 = vector.broadcast %56 : vector<1x16x16xf32> to vector<4x16x16xf32>
    %59 = arith.mulf %57, %58 : vector<4x16x16xf32>
    %60 = arith.addf %50, %59 : vector<4x16x16xf32>
    %c0_42 = arith.constant 0 : index
    %c6 = arith.constant 6 : index
    %c0_43 = arith.constant 0 : index
    %c0_44 = arith.constant 0 : index
    %61 = vector.load %arg3[%c0_42, %c6, %c0_43, %c0_44] : memref<1x16x4x16xf32, #tpu.memory_space<vmem>>, vector<1x1x4x16xf32>
    %62 = vector.shape_cast %61 : vector<1x1x4x16xf32> to vector<4x16xf32>
    %c0_45 = arith.constant 0 : index
    %c6_46 = arith.constant 6 : index
    %c0_47 = arith.constant 0 : index
    %c0_48 = arith.constant 0 : index
    %63 = vector.load %arg4[%c0_45, %c6_46, %c0_47, %c0_48] : memref<1x16x16x16xf32, #tpu.memory_space<vmem>>, vector<1x1x16x16xf32>
    %64 = vector.shape_cast %63 : vector<1x1x16x16xf32> to vector<16x16xf32>
    %65 = vector.shape_cast %62 : vector<4x16xf32> to vector<4x1x16xf32>
    %66 = vector.shape_cast %64 : vector<16x16xf32> to vector<1x16x16xf32>
    %67 = vector.broadcast %65 : vector<4x1x16xf32> to vector<4x16x16xf32>
    %68 = vector.broadcast %66 : vector<1x16x16xf32> to vector<4x16x16xf32>
    %69 = arith.mulf %67, %68 : vector<4x16x16xf32>
    %70 = arith.addf %60, %69 : vector<4x16x16xf32>
    %c0_49 = arith.constant 0 : index
    %c7 = arith.constant 7 : index
    %c0_50 = arith.constant 0 : index
    %c0_51 = arith.constant 0 : index
    %71 = vector.load %arg3[%c0_49, %c7, %c0_50, %c0_51] : memref<1x16x4x16xf32, #tpu.memory_space<vmem>>, vector<1x1x4x16xf32>
    %72 = vector.shape_cast %71 : vector<1x1x4x16xf32> to vector<4x16xf32>
    %c0_52 = arith.constant 0 : index
    %c7_53 = arith.constant 7 : index
    %c0_54 = arith.constant 0 : index
    %c0_55 = arith.constant 0 : index
    %73 = vector.load %arg4[%c0_52, %c7_53, %c0_54, %c0_55] : memref<1x16x16x16xf32, #tpu.memory_space<vmem>>, vector<1x1x16x16xf32>
    %74 = vector.shape_cast %73 : vector<1x1x16x16xf32> to vector<16x16xf32>
    %75 = vector.shape_cast %72 : vector<4x16xf32> to vector<4x1x16xf32>
    %76 = vector.shape_cast %74 : vector<16x16xf32> to vector<1x16x16xf32>
    %77 = vector.broadcast %75 : vector<4x1x16xf32> to vector<4x16x16xf32>
    %78 = vector.broadcast %76 : vector<1x16x16xf32> to vector<4x16x16xf32>
    %79 = arith.mulf %77, %78 : vector<4x16x16xf32>
    %80 = arith.addf %70, %79 : vector<4x16x16xf32>
    %c0_56 = arith.constant 0 : index
    %c8 = arith.constant 8 : index
    %c0_57 = arith.constant 0 : index
    %c0_58 = arith.constant 0 : index
    %81 = vector.load %arg3[%c0_56, %c8, %c0_57, %c0_58] : memref<1x16x4x16xf32, #tpu.memory_space<vmem>>, vector<1x1x4x16xf32>
    %82 = vector.shape_cast %81 : vector<1x1x4x16xf32> to vector<4x16xf32>
    %c0_59 = arith.constant 0 : index
    %c8_60 = arith.constant 8 : index
    %c0_61 = arith.constant 0 : index
    %c0_62 = arith.constant 0 : index
    %83 = vector.load %arg4[%c0_59, %c8_60, %c0_61, %c0_62] : memref<1x16x16x16xf32, #tpu.memory_space<vmem>>, vector<1x1x16x16xf32>
    %84 = vector.shape_cast %83 : vector<1x1x16x16xf32> to vector<16x16xf32>
    %85 = vector.shape_cast %82 : vector<4x16xf32> to vector<4x1x16xf32>
    %86 = vector.shape_cast %84 : vector<16x16xf32> to vector<1x16x16xf32>
    %87 = vector.broadcast %85 : vector<4x1x16xf32> to vector<4x16x16xf32>
    %88 = vector.broadcast %86 : vector<1x16x16xf32> to vector<4x16x16xf32>
    %89 = arith.mulf %87, %88 : vector<4x16x16xf32>
    %90 = arith.addf %80, %89 : vector<4x16x16xf32>
    %c0_63 = arith.constant 0 : index
    %c9 = arith.constant 9 : index
    %c0_64 = arith.constant 0 : index
    %c0_65 = arith.constant 0 : index
    %91 = vector.load %arg3[%c0_63, %c9, %c0_64, %c0_65] : memref<1x16x4x16xf32, #tpu.memory_space<vmem>>, vector<1x1x4x16xf32>
    %92 = vector.shape_cast %91 : vector<1x1x4x16xf32> to vector<4x16xf32>
    %c0_66 = arith.constant 0 : index
    %c9_67 = arith.constant 9 : index
    %c0_68 = arith.constant 0 : index
    %c0_69 = arith.constant 0 : index
    %93 = vector.load %arg4[%c0_66, %c9_67, %c0_68, %c0_69] : memref<1x16x16x16xf32, #tpu.memory_space<vmem>>, vector<1x1x16x16xf32>
    %94 = vector.shape_cast %93 : vector<1x1x16x16xf32> to vector<16x16xf32>
    %95 = vector.shape_cast %92 : vector<4x16xf32> to vector<4x1x16xf32>
    %96 = vector.shape_cast %94 : vector<16x16xf32> to vector<1x16x16xf32>
    %97 = vector.broadcast %95 : vector<4x1x16xf32> to vector<4x16x16xf32>
    %98 = vector.broadcast %96 : vector<1x16x16xf32> to vector<4x16x16xf32>
    %99 = arith.mulf %97, %98 : vector<4x16x16xf32>
    %100 = arith.addf %90, %99 : vector<4x16x16xf32>
    %c0_70 = arith.constant 0 : index
    %c10 = arith.constant 10 : index
    %c0_71 = arith.constant 0 : index
    %c0_72 = arith.constant 0 : index
    %101 = vector.load %arg3[%c0_70, %c10, %c0_71, %c0_72] : memref<1x16x4x16xf32, #tpu.memory_space<vmem>>, vector<1x1x4x16xf32>
    %102 = vector.shape_cast %101 : vector<1x1x4x16xf32> to vector<4x16xf32>
    %c0_73 = arith.constant 0 : index
    %c10_74 = arith.constant 10 : index
    %c0_75 = arith.constant 0 : index
    %c0_76 = arith.constant 0 : index
    %103 = vector.load %arg4[%c0_73, %c10_74, %c0_75, %c0_76] : memref<1x16x16x16xf32, #tpu.memory_space<vmem>>, vector<1x1x16x16xf32>
    %104 = vector.shape_cast %103 : vector<1x1x16x16xf32> to vector<16x16xf32>
    %105 = vector.shape_cast %102 : vector<4x16xf32> to vector<4x1x16xf32>
    %106 = vector.shape_cast %104 : vector<16x16xf32> to vector<1x16x16xf32>
    %107 = vector.broadcast %105 : vector<4x1x16xf32> to vector<4x16x16xf32>
    %108 = vector.broadcast %106 : vector<1x16x16xf32> to vector<4x16x16xf32>
    %109 = arith.mulf %107, %108 : vector<4x16x16xf32>
    %110 = arith.addf %100, %109 : vector<4x16x16xf32>
    %c0_77 = arith.constant 0 : index
    %c11 = arith.constant 11 : index
    %c0_78 = arith.constant 0 : index
    %c0_79 = arith.constant 0 : index
    %111 = vector.load %arg3[%c0_77, %c11, %c0_78, %c0_79] : memref<1x16x4x16xf32, #tpu.memory_space<vmem>>, vector<1x1x4x16xf32>
    %112 = vector.shape_cast %111 : vector<1x1x4x16xf32> to vector<4x16xf32>
    %c0_80 = arith.constant 0 : index
    %c11_81 = arith.constant 11 : index
    %c0_82 = arith.constant 0 : index
    %c0_83 = arith.constant 0 : index
    %113 = vector.load %arg4[%c0_80, %c11_81, %c0_82, %c0_83] : memref<1x16x16x16xf32, #tpu.memory_space<vmem>>, vector<1x1x16x16xf32>
    %114 = vector.shape_cast %113 : vector<1x1x16x16xf32> to vector<16x16xf32>
    %115 = vector.shape_cast %112 : vector<4x16xf32> to vector<4x1x16xf32>
    %116 = vector.shape_cast %114 : vector<16x16xf32> to vector<1x16x16xf32>
    %117 = vector.broadcast %115 : vector<4x1x16xf32> to vector<4x16x16xf32>
    %118 = vector.broadcast %116 : vector<1x16x16xf32> to vector<4x16x16xf32>
    %119 = arith.mulf %117, %118 : vector<4x16x16xf32>
    %120 = arith.addf %110, %119 : vector<4x16x16xf32>
    %c0_84 = arith.constant 0 : index
    %c12 = arith.constant 12 : index
    %c0_85 = arith.constant 0 : index
    %c0_86 = arith.constant 0 : index
    %121 = vector.load %arg3[%c0_84, %c12, %c0_85, %c0_86] : memref<1x16x4x16xf32, #tpu.memory_space<vmem>>, vector<1x1x4x16xf32>
    %122 = vector.shape_cast %121 : vector<1x1x4x16xf32> to vector<4x16xf32>
    %c0_87 = arith.constant 0 : index
    %c12_88 = arith.constant 12 : index
    %c0_89 = arith.constant 0 : index
    %c0_90 = arith.constant 0 : index
    %123 = vector.load %arg4[%c0_87, %c12_88, %c0_89, %c0_90] : memref<1x16x16x16xf32, #tpu.memory_space<vmem>>, vector<1x1x16x16xf32>
    %124 = vector.shape_cast %123 : vector<1x1x16x16xf32> to vector<16x16xf32>
    %125 = vector.shape_cast %122 : vector<4x16xf32> to vector<4x1x16xf32>
    %126 = vector.shape_cast %124 : vector<16x16xf32> to vector<1x16x16xf32>
    %127 = vector.broadcast %125 : vector<4x1x16xf32> to vector<4x16x16xf32>
    %128 = vector.broadcast %126 : vector<1x16x16xf32> to vector<4x16x16xf32>
    %129 = arith.mulf %127, %128 : vector<4x16x16xf32>
    %130 = arith.addf %120, %129 : vector<4x16x16xf32>
    %c0_91 = arith.constant 0 : index
    %c13 = arith.constant 13 : index
    %c0_92 = arith.constant 0 : index
    %c0_93 = arith.constant 0 : index
    %131 = vector.load %arg3[%c0_91, %c13, %c0_92, %c0_93] : memref<1x16x4x16xf32, #tpu.memory_space<vmem>>, vector<1x1x4x16xf32>
    %132 = vector.shape_cast %131 : vector<1x1x4x16xf32> to vector<4x16xf32>
    %c0_94 = arith.constant 0 : index
    %c13_95 = arith.constant 13 : index
    %c0_96 = arith.constant 0 : index
    %c0_97 = arith.constant 0 : index
    %133 = vector.load %arg4[%c0_94, %c13_95, %c0_96, %c0_97] : memref<1x16x16x16xf32, #tpu.memory_space<vmem>>, vector<1x1x16x16xf32>
    %134 = vector.shape_cast %133 : vector<1x1x16x16xf32> to vector<16x16xf32>
    %135 = vector.shape_cast %132 : vector<4x16xf32> to vector<4x1x16xf32>
    %136 = vector.shape_cast %134 : vector<16x16xf32> to vector<1x16x16xf32>
    %137 = vector.broadcast %135 : vector<4x1x16xf32> to vector<4x16x16xf32>
    %138 = vector.broadcast %136 : vector<1x16x16xf32> to vector<4x16x16xf32>
    %139 = arith.mulf %137, %138 : vector<4x16x16xf32>
    %140 = arith.addf %130, %139 : vector<4x16x16xf32>
    %c0_98 = arith.constant 0 : index
    %c14 = arith.constant 14 : index
    %c0_99 = arith.constant 0 : index
    %c0_100 = arith.constant 0 : index
    %141 = vector.load %arg3[%c0_98, %c14, %c0_99, %c0_100] : memref<1x16x4x16xf32, #tpu.memory_space<vmem>>, vector<1x1x4x16xf32>
    %142 = vector.shape_cast %141 : vector<1x1x4x16xf32> to vector<4x16xf32>
    %c0_101 = arith.constant 0 : index
    %c14_102 = arith.constant 14 : index
    %c0_103 = arith.constant 0 : index
    %c0_104 = arith.constant 0 : index
    %143 = vector.load %arg4[%c0_101, %c14_102, %c0_103, %c0_104] : memref<1x16x16x16xf32, #tpu.memory_space<vmem>>, vector<1x1x16x16xf32>
    %144 = vector.shape_cast %143 : vector<1x1x16x16xf32> to vector<16x16xf32>
    %145 = vector.shape_cast %142 : vector<4x16xf32> to vector<4x1x16xf32>
    %146 = vector.shape_cast %144 : vector<16x16xf32> to vector<1x16x16xf32>
    %147 = vector.broadcast %145 : vector<4x1x16xf32> to vector<4x16x16xf32>
    %148 = vector.broadcast %146 : vector<1x16x16xf32> to vector<4x16x16xf32>
    %149 = arith.mulf %147, %148 : vector<4x16x16xf32>
    %150 = arith.addf %140, %149 : vector<4x16x16xf32>
    %c0_105 = arith.constant 0 : index
    %c15 = arith.constant 15 : index
    %c0_106 = arith.constant 0 : index
    %c0_107 = arith.constant 0 : index
    %151 = vector.load %arg3[%c0_105, %c15, %c0_106, %c0_107] : memref<1x16x4x16xf32, #tpu.memory_space<vmem>>, vector<1x1x4x16xf32>
    %152 = vector.shape_cast %151 : vector<1x1x4x16xf32> to vector<4x16xf32>
    %c0_108 = arith.constant 0 : index
    %c15_109 = arith.constant 15 : index
    %c0_110 = arith.constant 0 : index
    %c0_111 = arith.constant 0 : index
    %153 = vector.load %arg4[%c0_108, %c15_109, %c0_110, %c0_111] : memref<1x16x16x16xf32, #tpu.memory_space<vmem>>, vector<1x1x16x16xf32>
    %154 = vector.shape_cast %153 : vector<1x1x16x16xf32> to vector<16x16xf32>
    %155 = vector.shape_cast %152 : vector<4x16xf32> to vector<4x1x16xf32>
    %156 = vector.shape_cast %154 : vector<16x16xf32> to vector<1x16x16xf32>
    %157 = vector.broadcast %155 : vector<4x1x16xf32> to vector<4x16x16xf32>
    %158 = vector.broadcast %156 : vector<1x16x16xf32> to vector<4x16x16xf32>
    %159 = arith.mulf %157, %158 : vector<4x16x16xf32>
    %160 = arith.addf %150, %159 : vector<4x16x16xf32>
    %c0_112 = arith.constant 0 : index
    %c0_113 = arith.constant 0 : index
    %c0_114 = arith.constant 0 : index
    %c0_115 = arith.constant 0 : index
    %161 = vector.load %arg5[%c0_112, %c0_113, %c0_114, %c0_115] : memref<1x4x16x16xf32, #tpu.memory_space<vmem>>, vector<1x4x16x16xf32>
    %162 = vector.shape_cast %161 : vector<1x4x16x16xf32> to vector<4x16x16xf32>
    %163 = vector.shape_cast %160 : vector<4x16x16xf32> to vector<1x4x16x16xf32>
    tpu.vector_store %arg5[%c0_112, %c0_113, %c0_114, %c0_115], %163 {strides = array<i32>} : memref<1x4x16x16xf32, #tpu.memory_space<vmem>>, vector<1x4x16x16xf32>,
    return
  }
  func.func @transform_0(%arg0: i32, %arg1: i32, %arg2: i32) -> (i32, i32, i32, i32) {
    %c0_i32 = arith.constant 0 : i32
    %c0_i32_0 = arith.constant 0 : i32
    %c0_i32_1 = arith.constant 0 : i32
    return %arg0, %c0_i32, %c0_i32_0, %arg1 : i32, i32, i32, i32
  }
  func.func @transform_1(%arg0: i32, %arg1: i32, %arg2: i32) -> (i32, i32, i32, i32) {
    %c0_i32 = arith.constant 0 : i32
    %c0_i32_0 = arith.constant 0 : i32
    return %arg0, %c0_i32, %arg2, %arg1 : i32, i32, i32, i32
  }
  func.func @transform_2(%arg0: i32, %arg1: i32, %arg2: i32) -> (i32, i32, i32, i32) {
    %c0_i32 = arith.constant 0 : i32
    %c0_i32_0 = arith.constant 0 : i32
    return %arg0, %c0_i32, %arg2, %arg1 : i32, i32, i32, i32
  }
}

</mosaic_0001>

<llo_original>
// kernel: tpu_custom_call.1
$region0: #{tpu_custom_call.1}
  #allocation0 [shape = 'u32[]', space=smem, size = 0x4, offset = 0x4, fixed_abs, tag = 'smem constant byte address 0x4 - core index']
  #allocation1 [shape = 'u32[144,128]{1,0:T(1,128)}', space=vmem, size = 0x12000, scoped, tag = 'internal scratch']
  %s0 = inlined_call_operand.hbm [shape: f32[2,16,4,16], index: 0, kind: input, shape index: {}]
  %s1 = inlined_call_operand.hbm [shape: f32[2,16,16,16], index: 1, kind: input, shape index: {}]
  %s2 = inlined_call_operand.hbm [shape: f32[2,4,16,16], index: 2, kind: output, shape index: {}]
  %s3 = sld [smem:[#allocation0]]
  $region49: #{tpu_custom_call.1} parent=0
    _
  %s5 = ssub.s32 1, %s3
  %s6 = scalar_select 0, %s5, %s3
  $region1: #{tpu_custom_call.1} parent=0
    #allocation2 [shape = 'u8[65536]{0}', space=vmem, size = 0x10000, scoped, tag = 'input window, operand 0']
    #allocation3 [shape = 's32[2]{0}', space=sflag, size = 0x8, scoped, tag = 'scoped memory for tpu_custom_call.1']
    #allocation4 [shape = 's32[2]{0}', space=sflag, size = 0x8, scoped, tag = 'scoped memory for tpu_custom_call.1']
    #allocation5 [shape = 'u8[262144]{0}', space=vmem, size = 0x40000, scoped, tag = 'input window, operand 1']
    #allocation6 [shape = 's32[2]{0}', space=sflag, size = 0x8, scoped, tag = 'scoped memory for tpu_custom_call.1']
    #allocation7 [shape = 'u8[65536]{0}', space=vmem, size = 0x10000, scoped, tag = 'output window, operand 0']
    %7 = vsyncpa [#allocation3], 0
    %s8 = scalar_lea.sflag [#allocation3], 1
    %9 = vsyncpa %s8, 0
    %10 = vsyncpa [#allocation6], 0
    %s11 = scalar_lea.sflag [#allocation6], 1
    %12 = vsyncpa %s11, 0
    %13 = vsyncpa [#allocation4], 0
    %s14 = scalar_lea.sflag [#allocation4], 1
    %15 = vsyncpa %s14, 0
    loop: start=0, step=1, limit=4
    $region2: #{tpu_custom_call.1} parent=1 // loop_pre_header
      _
    $region3: #{tpu_custom_call.1} parent=1 // loop_header
      %s17 = sphi 0, %s21
      %p18 = scmp.ge.s32.totalorder %s17, 4
      %s24 = sphi 0, %s43
      %s25 = sphi 0, %s39
      %s26 = sphi 0, %s35
      %s27 = sphi 0, %s24
      %s28 = sphi 0, %s25
      %s29 = sphi 0, %s26
      %s30 = sphi 0, %s27
      %s31 = sphi 0, %s28
      %s32 = sphi 0, %s29
      %s48 = sphi 0, %s50
      %s51 = sphi 0, %s48
      %s52 = sphi 0, %s51
      %s68 = sphi 0, %s52
      %s78 = sphi 0, %s80
      %s81 = sphi 0, %s78
      %s82 = sphi 0, %s81
      %s98 = sphi 0, %s82
      %s108 = sphi 0, %s110
      %s111 = sphi 0, %s108
      %s112 = sphi 0, %s111
      %s128 = sphi 0, %s112
    $region4: #{tpu_custom_call.1} parent=1 // loop_header_branch
      %20 = sbr.rel (%p18) target = $region8
    $region5: #{tpu_custom_call.1} parent=1 // loop_body
      %s22 = ssub.s32 %s17, 1
      %s23 = ssub.s32 %s17, 2
      %s33 = sadd.s32 1, %s26
      %p34 = scmp.ge.s32.totalorder %s33, 1
      %s35 = scalar_select %p34, 0, %s33
      %s36 = sadd.s32 1, %s25
      %s37 = scalar_select %p34, %s36, %s25
      %p38 = scmp.ge.s32.totalorder %s37, 1
      %s39 = scalar_select %p38, 0, %s37
      %s40 = sadd.s32 1, %s24
      %s41 = scalar_select %p38, %s40, %s24
      %p42 = scmp.ge.s32.totalorder %s41, 2
      %s43 = scalar_select %p42, 0, %s41
      %s44 = ssub.s32 %s24, %s43
      %s45 = ssub.s32 %s25, %s39
      %s46 = sor.u32 %s44, %s45
      %p47 = scmp.eq.s32.totalorder %s46, 0
      %s49 = sadd.s32 %s48, 1
      %s50 = scalar_select %p47, %s48, %s49
      %p53 = pneg %p47
      %p54 = scmp.eq.s32.totalorder %s17, 1
      %p55 = por %p53, %p54
      %p56 = scmp.ne.s32.totalorder %s48, %s51
      %p57 = scmp.eq.s32.totalorder %s17, 0
      %p58 = por %p56, %p57
      %p59 = scmp.ne.s32.totalorder %s48, %s51
      %p60 = scmp.eq.s32.totalorder %s22, 1
      %p61 = por %p59, %p60
      %p62 = scmp.ne.s32.totalorder %s51, %s52
      %p63 = scmp.eq.s32.totalorder %s22, 0
      %p64 = por %p62, %p63
      %p65 = scmp.ne.s32.totalorder %s51, %s52
      %p66 = scmp.eq.s32.totalorder %s23, 1
      %p67 = por %p65, %p66
      %p69 = scmp.ne.s32.totalorder %s52, %s68
      %p70 = scmp.eq.s32.totalorder %s23, 0
      %p71 = por %p69, %p70
      %s72 = ssub.s32 %s24, %s43
      %s73 = ssub.s32 %s26, %s35
      %s74 = sor.u32 %s72, %s73
      %s75 = ssub.s32 %s25, %s39
      %s76 = sor.u32 %s74, %s75
      %p77 = scmp.eq.s32.totalorder %s76, 0
      %s79 = sadd.s32 %s78, 1
      %s80 = scalar_select %p77, %s78, %s79
      %p83 = pneg %p77
      %p84 = scmp.eq.s32.totalorder %s17, 1
      %p85 = por %p83, %p84
      %p86 = scmp.ne.s32.totalorder %s78, %s81
      %p87 = scmp.eq.s32.totalorder %s17, 0
      %p88 = por %p86, %p87
      %p89 = scmp.ne.s32.totalorder %s78, %s81
      %p90 = scmp.eq.s32.totalorder %s22, 1
      %p91 = por %p89, %p90
      %p92 = scmp.ne.s32.totalorder %s81, %s82
      %p93 = scmp.eq.s32.totalorder %s22, 0
      %p94 = por %p92, %p93
      %p95 = scmp.ne.s32.totalorder %s81, %s82
      %p96 = scmp.eq.s32.totalorder %s23, 1
      %p97 = por %p95, %p96
      %p99 = scmp.ne.s32.totalorder %s82, %s98
      %p100 = scmp.eq.s32.totalorder %s23, 0
      %p101 = por %p99, %p100
      %s102 = ssub.s32 %s24, %s43
      %s103 = ssub.s32 %s26, %s35
      %s104 = sor.u32 %s102, %s103
      %s105 = ssub.s32 %s25, %s39
      %s106 = sor.u32 %s104, %s105
      %p107 = scmp.eq.s32.totalorder %s106, 0
      %s109 = sadd.s32 %s108, 1
      %s110 = scalar_select %p107, %s108, %s109
      %p113 = pneg %p107
      %p114 = scmp.eq.s32.totalorder %s17, 1
      %p115 = por %p113, %p114
      %p116 = scmp.ne.s32.totalorder %s108, %s111
      %p117 = scmp.eq.s32.totalorder %s17, 0
      %p118 = por %p116, %p117
      %p119 = scmp.ne.s32.totalorder %s108, %s111
      %p120 = scmp.eq.s32.totalorder %s22, 1
      %p121 = por %p119, %p120
      %p122 = scmp.ne.s32.totalorder %s111, %s112
      %p123 = scmp.eq.s32.totalorder %s22, 0
      %p124 = por %p122, %p123
      %p125 = scmp.ne.s32.totalorder %s111, %s112
      %p126 = scmp.eq.s32.totalorder %s23, 1
      %p127 = por %p125, %p126
      %p129 = scmp.ne.s32.totalorder %s112, %s128
      %p130 = scmp.eq.s32.totalorder %s23, 0
      %p131 = por %p129, %p130
      %p132 = scmp.le.s32.totalorder 1, %s17
      %p133 = scmp.lt.s32.totalorder %s17, 3
      %p134 = pnand %p132, %p133
      %p135 = pneg %p134
      // Predicated region
      $region9: #{tpu_custom_call.1} parent=5 // pred_check
        _
      $region10: #{tpu_custom_call.1} parent=5 // pred_check_branch
        %137 = sbr.rel (%p134) target = $region12
      $region11: #{tpu_custom_call.1} parent=5 // pred_region
        %s138 = ssub.s32 %s17, 1
      $region12: #{tpu_custom_call.1} parent=5 // pred_fallthru
        _
      %p139 = scmp.lt.s32.totalorder %s17, 2
      // Predicated region
      $region13: #{tpu_custom_call.1} parent=5 // pred_check
        %p140 = pneg %p139
      $region14: #{tpu_custom_call.1} parent=5 // pred_check_branch
        %142 = sbr.rel (%p140) target = $region16
      $region15: #{tpu_custom_call.1} parent=5 // pred_region
        // Predicated region
        $region17: #{tpu_custom_call.1} parent=15 // pred_check
          %p143 = pneg %p58
        $region18: #{tpu_custom_call.1} parent=15 // pred_check_branch
          %145 = sbr.rel (%p143) target = $region20
        $region19: #{tpu_custom_call.1} parent=15 // pred_region
          %s146 = sand.u32 %s48, 1
          %s147 = scalar_lea.sflag [#allocation3], %s146
          %s148 = sand.u32 %s48, 1
          %s149 = smul.addr %s148, 64
          %s150 = scalar_lea.vmem [#allocation2], %s149
          %s152 = ssub.s32 1024, 1024
          %153 = vsyncadd %s147, %s152
          %s154 = smul.addr %s24, 16
          %s155 = sadd.s32 %s25, %s154
          %s156 = smul.addr %s155, 64
          %s157 = scalar_lea.hbm %s0, %s156
          %s158 = sshll.u32 %s150, 4
          %s159 = int_to_ptr.vmem [resolvable:$true] %s158
          %164 = dma.hbm_to_vmem [thread:$0]  %s157, 1024, %s159, %s147, 64, 64, 4
        $region20: #{tpu_custom_call.1} parent=15 // pred_fallthru
          _
        // Predicated region
        $region21: #{tpu_custom_call.1} parent=15 // pred_check
          %p165 = pneg %p88
        $region22: #{tpu_custom_call.1} parent=15 // pred_check_branch
          %167 = sbr.rel (%p165) target = $region24
        $region23: #{tpu_custom_call.1} parent=15 // pred_region
          %s168 = sand.u32 %s78, 1
          %s169 = scalar_lea.sflag [#allocation6], %s168
          %s170 = sand.u32 %s78, 1
          %s171 = smul.addr %s170, 256
          %s172 = scalar_lea.vmem [#allocation5], %s171
          %s173 = smul.u32 2, %s26
          %s175 = ssub.s32 4096, 4096
          %176 = vsyncadd %s169, %s175
          %s177 = sadd.s32 %s25, %s173
          %s178 = smul.addr %s24, 32
          %s179 = sadd.s32 %s177, %s178
          %s180 = smul.addr %s179, 128
          %s181 = scalar_lea.hbm %s1, %s180
          %s182 = sshll.u32 %s172, 4
          %s183 = int_to_ptr.vmem [resolvable:$true] %s182
          %188 = dma.hbm_to_vmem [thread:$0]  %s181, 4096, %s183, %s169, 128, 128, 8
        $region24: #{tpu_custom_call.1} parent=15 // pred_fallthru
          _
      $region16: #{tpu_custom_call.1} parent=5 // pred_fallthru
        _
      %p189 = scmp.le.s32.totalorder 1, %s17
      %p190 = scmp.lt.s32.totalorder %s17, 3
      %p191 = pnand %p189, %p190
      %p192 = pneg %p191
      // Predicated region
      $region25: #{tpu_custom_call.1} parent=5 // pred_check
        _
      $region26: #{tpu_custom_call.1} parent=5 // pred_check_branch
        %194 = sbr.rel (%p191) target = $region28
      $region27: #{tpu_custom_call.1} parent=5 // pred_region
        %s195 = ssub.s32 %s17, 1
        %s196 = sand.u32 %s51, 1
        %s197 = scalar_lea.sflag [#allocation3], %s196
        %s198 = sand.u32 %s51, 1
        %s199 = smul.addr %s198, 64
        %s200 = scalar_lea.vmem [#allocation2], %s199
        // Predicated region
        $region29: #{tpu_custom_call.1} parent=27 // pred_check
          %p201 = pneg %p64
        $region30: #{tpu_custom_call.1} parent=27 // pred_check_branch
          %203 = sbr.rel (%p201) target = $region32
        $region31: #{tpu_custom_call.1} parent=27 // pred_region
          %204 = dma.done %s197, 1024
        $region32: #{tpu_custom_call.1} parent=27 // pred_fallthru
          _
        %s205 = sand.u32 %s81, 1
        %s206 = scalar_lea.sflag [#allocation6], %s205
        %s207 = sand.u32 %s81, 1
        %s208 = smul.addr %s207, 256
        %s209 = scalar_lea.vmem [#allocation5], %s208
        // Predicated region
        $region33: #{tpu_custom_call.1} parent=27 // pred_check
          %p210 = pneg %p94
        $region34: #{tpu_custom_call.1} parent=27 // pred_check_branch
          %212 = sbr.rel (%p210) target = $region36
        $region35: #{tpu_custom_call.1} parent=27 // pred_region
          %213 = dma.done %s206, 4096
        $region36: #{tpu_custom_call.1} parent=27 // pred_fallthru
          _
        %s214 = sand.u32 %s51, 1
        %s215 = scalar_lea.sflag [#allocation3], %s214
        %s216 = sand.u32 %s51, 1
        %s217 = smul.addr %s216, 64
        %s218 = scalar_lea.vmem [#allocation2], %s217
        %p219 = pneg %p64
        %p220 = pneg %p61
        %s221 = sand.u32 %s81, 1
        %s222 = scalar_lea.sflag [#allocation6], %s221
        %s223 = sand.u32 %s81, 1
        %s224 = smul.addr %s223, 256
        %s225 = scalar_lea.vmem [#allocation5], %s224
        %p226 = pneg %p94
        %p227 = pneg %p91
        %p228 = pneg %p124
        %p229 = pneg %p121
        %s230 = sand.u32 %s111, 1
        %s231 = scalar_lea.sflag [#allocation4], %s230
        %s232 = sand.u32 %s111, 1
        %s233 = smul.addr %s232, 64
        %s234 = scalar_lea.vmem [#allocation7], %s233
        %s235 = smul.u32 2, %s29
        %s236 = smul.u32 2, %s29
        %v237 = vld [vmem:[%s200] sm:$0xf]
        %v238 = vld [vmem:[%s209] sm:$0xff]
        %v239 = vld [vmem:[%s209 + $0x8] sm:$0xff]
        %v242 = vunpack.c.l.s4 1966171168
        %v243 = vunpack.c.0.s8 %v242
        %v244 = vlaneseq
        %v245 = vshrl.u32 %v244, 7
        %v246 = vsub.s32 %v243, %v245
        %v247 = vrot.slane %v237, %v246
        %v248 = vcombine.high %v247, %v247
        %v250 = vunpack.c.l.s4 1966171168
        %v251 = vunpack.c.0.s8 %v250
        %v252 = vlaneseq
        %v253 = vshrl.u32 %v252, 7
        %v254 = vsub.s32 %v251, %v253
        %v255 = vrot.slane %v247, %v254
        %v257 = vunpack.c.l.s4 1966171168
        %v258 = vunpack.c.0.s8 %v257
        %v259 = vlaneseq
        %v260 = vshrl.u32 %v259, 7
        %v261 = vsub.s32 %v258, %v260
        %v262 = vrot.slane %v248, %v261
        %v263 = vcombine.high %v255, %v255
        %v264 = vcombine.high %v262, %v262
        %v265 = vlaneseq
        %v266 = vshrl.u32 %v265, 7
        %v267 = vsub.s32 0, %v266
        %v268 = vrot.slane %v255, %v267
        %v269 = vlaneseq
        %v270 = vshrl.u32 %v269, 7
        %v271 = vsub.s32 0, %v270
        %v272 = vrot.slane %v262, %v271
        %v273 = vlaneseq
        %v274 = vshrl.u32 %v273, 7
        %v275 = vsub.s32 0, %v274
        %v276 = vrot.slane %v263, %v275
        %v277 = vlaneseq
        %v278 = vshrl.u32 %v277, 7
        %v279 = vsub.s32 0, %v278
        %v280 = vrot.slane %v264, %v279
        %v285 = vmul.f32 %v268, %v238
        %v286 = vmul.f32 %v268, %v239
        %v287 = vmul.f32 %v272, %v238
        %v288 = vmul.f32 %v272, %v239
        %v289 = vmul.f32 %v276, %v238
        %v290 = vmul.f32 %v276, %v239
        %v291 = vmul.f32 %v280, %v238
        %v292 = vmul.f32 %v280, %v239
        %v293 = vadd.f32 %v285, 0.0
        %v294 = vadd.f32 %v286, 0.0
        %v295 = vadd.f32 %v287, 0.0
        %v296 = vadd.f32 %v288, 0.0
        %v297 = vadd.f32 %v289, 0.0
        %v298 = vadd.f32 %v290, 0.0
        %v299 = vadd.f32 %v291, 0.0
        %v300 = vadd.f32 %v292, 0.0
        %s301 = scalar_lea.vmem %s200, 4 [#allocation2]
        %v302 = vld [vmem:[%s301] sm:$0xf]
        %s303 = scalar_lea.vmem %s209, 16 [#allocation5]
        %v304 = vld [vmem:[%s303] sm:$0xff]
        %v305 = vld [vmem:[%s303 + $0x8] sm:$0xff]
        %v308 = vunpack.c.l.s4 1966171168
        %v309 = vunpack.c.0.s8 %v308
        %v310 = vlaneseq
        %v311 = vshrl.u32 %v310, 7
        %v312 = vsub.s32 %v309, %v311
        %v313 = vrot.slane %v302, %v312
        %v314 = vcombine.high %v313, %v313
        %v316 = vunpack.c.l.s4 1966171168
        %v317 = vunpack.c.0.s8 %v316
        %v318 = vlaneseq
        %v319 = vshrl.u32 %v318, 7
        %v320 = vsub.s32 %v317, %v319
        %v321 = vrot.slane %v313, %v320
        %v323 = vunpack.c.l.s4 1966171168
        %v324 = vunpack.c.0.s8 %v323
        %v325 = vlaneseq
        %v326 = vshrl.u32 %v325, 7
        %v327 = vsub.s32 %v324, %v326
        %v328 = vrot.slane %v314, %v327
        %v329 = vcombine.high %v321, %v321
        %v330 = vcombine.high %v328, %v328
        %v331 = vlaneseq
        %v332 = vshrl.u32 %v331, 7
        %v333 = vsub.s32 0, %v332
        %v334 = vrot.slane %v321, %v333
        %v335 = vlaneseq
        %v336 = vshrl.u32 %v335, 7
        %v337 = vsub.s32 0, %v336
        %v338 = vrot.slane %v328, %v337
        %v339 = vlaneseq
        %v340 = vshrl.u32 %v339, 7
        %v341 = vsub.s32 0, %v340
        %v342 = vrot.slane %v329, %v341
        %v343 = vlaneseq
        %v344 = vshrl.u32 %v343, 7
        %v345 = vsub.s32 0, %v344
        %v346 = vrot.slane %v330, %v345
        %v351 = vmul.f32 %v334, %v304
        %v352 = vmul.f32 %v334, %v305
        %v353 = vmul.f32 %v338, %v304
        %v354 = vmul.f32 %v338, %v305
        %v355 = vmul.f32 %v342, %v304
        %v356 = vmul.f32 %v342, %v305
        %v357 = vmul.f32 %v346, %v304
        %v358 = vmul.f32 %v346, %v305
        %v359 = vadd.f32 %v293, %v351
        %v360 = vadd.f32 %v294, %v352
        %v361 = vadd.f32 %v295, %v353
        %v362 = vadd.f32 %v296, %v354
        %v363 = vadd.f32 %v297, %v355
        %v364 = vadd.f32 %v298, %v356
        %v365 = vadd.f32 %v299, %v357
        %v366 = vadd.f32 %v300, %v358
        %s367 = scalar_lea.vmem %s200, 8 [#allocation2]
        %v368 = vld [vmem:[%s367] sm:$0xf]
        %s369 = scalar_lea.vmem %s209, 32 [#allocation5]
        %v370 = vld [vmem:[%s369] sm:$0xff]
        %v371 = vld [vmem:[%s369 + $0x8] sm:$0xff]
        %v374 = vunpack.c.l.s4 1966171168
        %v375 = vunpack.c.0.s8 %v374
        %v376 = vlaneseq
        %v377 = vshrl.u32 %v376, 7
        %v378 = vsub.s32 %v375, %v377
        %v379 = vrot.slane %v368, %v378
        %v380 = vcombine.high %v379, %v379
        %v382 = vunpack.c.l.s4 1966171168
        %v383 = vunpack.c.0.s8 %v382
        %v384 = vlaneseq
        %v385 = vshrl.u32 %v384, 7
        %v386 = vsub.s32 %v383, %v385
        %v387 = vrot.slane %v379, %v386
        %v389 = vunpack.c.l.s4 1966171168
        %v390 = vunpack.c.0.s8 %v389
        %v391 = vlaneseq
        %v392 = vshrl.u32 %v391, 7
        %v393 = vsub.s32 %v390, %v392
        %v394 = vrot.slane %v380, %v393
        %v395 = vcombine.high %v387, %v387
        %v396 = vcombine.high %v394, %v394
        %v397 = vlaneseq
        %v398 = vshrl.u32 %v397, 7
        %v399 = vsub.s32 0, %v398
        %v400 = vrot.slane %v387, %v399
        %v401 = vlaneseq
        %v402 = vshrl.u32 %v401, 7
        %v403 = vsub.s32 0, %v402
        %v404 = vrot.slane %v394, %v403
        %v405 = vlaneseq
        %v406 = vshrl.u32 %v405, 7
        %v407 = vsub.s32 0, %v406
        %v408 = vrot.slane %v395, %v407
        %v409 = vlaneseq
        %v410 = vshrl.u32 %v409, 7
        %v411 = vsub.s32 0, %v410
        %v412 = vrot.slane %v396, %v411
        %v417 = vmul.f32 %v400, %v370
        %v418 = vmul.f32 %v400, %v371
        %v419 = vmul.f32 %v404, %v370
        %v420 = vmul.f32 %v404, %v371
        %v421 = vmul.f32 %v408, %v370
        %v422 = vmul.f32 %v408, %v371
        %v423 = vmul.f32 %v412, %v370
        %v424 = vmul.f32 %v412, %v371
        %v425 = vadd.f32 %v359, %v417
        %v426 = vadd.f32 %v360, %v418
        %v427 = vadd.f32 %v361, %v419
        %v428 = vadd.f32 %v362, %v420
        %v429 = vadd.f32 %v363, %v421
        %v430 = vadd.f32 %v364, %v422
        %v431 = vadd.f32 %v365, %v423
        %v432 = vadd.f32 %v366, %v424
        %s433 = scalar_lea.vmem %s200, 12 [#allocation2]
        %v434 = vld [vmem:[%s433] sm:$0xf]
        %s435 = scalar_lea.vmem %s209, 48 [#allocation5]
        %v436 = vld [vmem:[%s435] sm:$0xff]
        %v437 = vld [vmem:[%s435 + $0x8] sm:$0xff]
        %v440 = vunpack.c.l.s4 1966171168
        %v441 = vunpack.c.0.s8 %v440
        %v442 = vlaneseq
        %v443 = vshrl.u32 %v442, 7
        %v444 = vsub.s32 %v441, %v443
        %v445 = vrot.slane %v434, %v444
        %v446 = vcombine.high %v445, %v445
        %v448 = vunpack.c.l.s4 1966171168
        %v449 = vunpack.c.0.s8 %v448
        %v450 = vlaneseq
        %v451 = vshrl.u32 %v450, 7
        %v452 = vsub.s32 %v449, %v451
        %v453 = vrot.slane %v445, %v452
        %v455 = vunpack.c.l.s4 1966171168
        %v456 = vunpack.c.0.s8 %v455
        %v457 = vlaneseq
        %v458 = vshrl.u32 %v457, 7
        %v459 = vsub.s32 %v456, %v458
        %v460 = vrot.slane %v446, %v459
        %v461 = vcombine.high %v453, %v453
        %v462 = vcombine.high %v460, %v460
        %v463 = vlaneseq
        %v464 = vshrl.u32 %v463, 7
        %v465 = vsub.s32 0, %v464
        %v466 = vrot.slane %v453, %v465
        %v467 = vlaneseq
        %v468 = vshrl.u32 %v467, 7
        %v469 = vsub.s32 0, %v468
        %v470 = vrot.slane %v460, %v469
        %v471 = vlaneseq
        %v472 = vshrl.u32 %v471, 7
        %v473 = vsub.s32 0, %v472
        %v474 = vrot.slane %v461, %v473
        %v475 = vlaneseq
        %v476 = vshrl.u32 %v475, 7
        %v477 = vsub.s32 0, %v476
        %v478 = vrot.slane %v462, %v477
        %v483 = vmul.f32 %v466, %v436
        %v484 = vmul.f32 %v466, %v437
        %v485 = vmul.f32 %v470, %v436
        %v486 = vmul.f32 %v470, %v437
        %v487 = vmul.f32 %v474, %v436
        %v488 = vmul.f32 %v474, %v437
        %v489 = vmul.f32 %v478, %v436
        %v490 = vmul.f32 %v478, %v437
        %v491 = vadd.f32 %v425, %v483
        %v492 = vadd.f32 %v426, %v484
        %v493 = vadd.f32 %v427, %v485
        %v494 = vadd.f32 %v428, %v486
        %v495 = vadd.f32 %v429, %v487
        %v496 = vadd.f32 %v430, %v488
        %v497 = vadd.f32 %v431, %v489
        %v498 = vadd.f32 %v432, %v490
        %s499 = scalar_lea.vmem %s200, 16 [#allocation2]
        %v500 = vld [vmem:[%s499] sm:$0xf]
        %s501 = scalar_lea.vmem %s209, 64 [#allocation5]
        %v502 = vld [vmem:[%s501] sm:$0xff]
        %v503 = vld [vmem:[%s501 + $0x8] sm:$0xff]
        %v506 = vunpack.c.l.s4 1966171168
        %v507 = vunpack.c.0.s8 %v506
        %v508 = vlaneseq
        %v509 = vshrl.u32 %v508, 7
        %v510 = vsub.s32 %v507, %v509
        %v511 = vrot.slane %v500, %v510
        %v512 = vcombine.high %v511, %v511
        %v514 = vunpack.c.l.s4 1966171168
        %v515 = vunpack.c.0.s8 %v514
        %v516 = vlaneseq
        %v517 = vshrl.u32 %v516, 7
        %v518 = vsub.s32 %v515, %v517
        %v519 = vrot.slane %v511, %v518
        %v521 = vunpack.c.l.s4 1966171168
        %v522 = vunpack.c.0.s8 %v521
        %v523 = vlaneseq
        %v524 = vshrl.u32 %v523, 7
        %v525 = vsub.s32 %v522, %v524
        %v526 = vrot.slane %v512, %v525
        %v527 = vcombine.high %v519, %v519
        %v528 = vcombine.high %v526, %v526
        %v529 = vlaneseq
        %v530 = vshrl.u32 %v529, 7
        %v531 = vsub.s32 0, %v530
        %v532 = vrot.slane %v519, %v531
        %v533 = vlaneseq
        %v534 = vshrl.u32 %v533, 7
        %v535 = vsub.s32 0, %v534
        %v536 = vrot.slane %v526, %v535
        %v537 = vlaneseq
        %v538 = vshrl.u32 %v537, 7
        %v539 = vsub.s32 0, %v538
        %v540 = vrot.slane %v527, %v539
        %v541 = vlaneseq
        %v542 = vshrl.u32 %v541, 7
        %v543 = vsub.s32 0, %v542
        %v544 = vrot.slane %v528, %v543
        %v549 = vmul.f32 %v532, %v502
        %v550 = vmul.f32 %v532, %v503
        %v551 = vmul.f32 %v536, %v502
        %v552 = vmul.f32 %v536, %v503
        %v553 = vmul.f32 %v540, %v502
        %v554 = vmul.f32 %v540, %v503
        %v555 = vmul.f32 %v544, %v502
        %v556 = vmul.f32 %v544, %v503
        %v557 = vadd.f32 %v491, %v549
        %v558 = vadd.f32 %v492, %v550
        %v559 = vadd.f32 %v493, %v551
        %v560 = vadd.f32 %v494, %v552
        %v561 = vadd.f32 %v495, %v553
        %v562 = vadd.f32 %v496, %v554
        %v563 = vadd.f32 %v497, %v555
        %v564 = vadd.f32 %v498, %v556
        %s565 = scalar_lea.vmem %s200, 20 [#allocation2]
        %v566 = vld [vmem:[%s565] sm:$0xf]
        %s567 = scalar_lea.vmem %s209, 80 [#allocation5]
        %v568 = vld [vmem:[%s567] sm:$0xff]
        %v569 = vld [vmem:[%s567 + $0x8] sm:$0xff]
        %v572 = vunpack.c.l.s4 1966171168
        %v573 = vunpack.c.0.s8 %v572
        %v574 = vlaneseq
        %v575 = vshrl.u32 %v574, 7
        %v576 = vsub.s32 %v573, %v575
        %v577 = vrot.slane %v566, %v576
        %v578 = vcombine.high %v577, %v577
        %v580 = vunpack.c.l.s4 1966171168
        %v581 = vunpack.c.0.s8 %v580
        %v582 = vlaneseq
        %v583 = vshrl.u32 %v582, 7
        %v584 = vsub.s32 %v581, %v583
        %v585 = vrot.slane %v577, %v584
        %v587 = vunpack.c.l.s4 1966171168
        %v588 = vunpack.c.0.s8 %v587
        %v589 = vlaneseq
        %v590 = vshrl.u32 %v589, 7
        %v591 = vsub.s32 %v588, %v590
        %v592 = vrot.slane %v578, %v591
        %v593 = vcombine.high %v585, %v585
        %v594 = vcombine.high %v592, %v592
        %v595 = vlaneseq
        %v596 = vshrl.u32 %v595, 7
        %v597 = vsub.s32 0, %v596
        %v598 = vrot.slane %v585, %v597
        %v599 = vlaneseq
        %v600 = vshrl.u32 %v599, 7
        %v601 = vsub.s32 0, %v600
        %v602 = vrot.slane %v592, %v601
        %v603 = vlaneseq
        %v604 = vshrl.u32 %v603, 7
        %v605 = vsub.s32 0, %v604
        %v606 = vrot.slane %v593, %v605
        %v607 = vlaneseq
        %v608 = vshrl.u32 %v607, 7
        %v609 = vsub.s32 0, %v608
        %v610 = vrot.slane %v594, %v609
        %v615 = vmul.f32 %v598, %v568
        %v616 = vmul.f32 %v598, %v569
        %v617 = vmul.f32 %v602, %v568
        %v618 = vmul.f32 %v602, %v569
        %v619 = vmul.f32 %v606, %v568
        %v620 = vmul.f32 %v606, %v569
        %v621 = vmul.f32 %v610, %v568
        %v622 = vmul.f32 %v610, %v569
        %v623 = vadd.f32 %v557, %v615
        %v624 = vadd.f32 %v558, %v616
        %v625 = vadd.f32 %v559, %v617
        %v626 = vadd.f32 %v560, %v618
        %v627 = vadd.f32 %v561, %v619
        %v628 = vadd.f32 %v562, %v620
        %v629 = vadd.f32 %v563, %v621
        %v630 = vadd.f32 %v564, %v622
        %s631 = scalar_lea.vmem %s200, 24 [#allocation2]
        %v632 = vld [vmem:[%s631] sm:$0xf]
        %s633 = scalar_lea.vmem %s209, 96 [#allocation5]
        %v634 = vld [vmem:[%s633] sm:$0xff]
        %v635 = vld [vmem:[%s633 + $0x8] sm:$0xff]
        %v638 = vunpack.c.l.s4 1966171168
        %v639 = vunpack.c.0.s8 %v638
        %v640 = vlaneseq
        %v641 = vshrl.u32 %v640, 7
        %v642 = vsub.s32 %v639, %v641
        %v643 = vrot.slane %v632, %v642
        %v644 = vcombine.high %v643, %v643
        %v646 = vunpack.c.l.s4 1966171168
        %v647 = vunpack.c.0.s8 %v646
        %v648 = vlaneseq
        %v649 = vshrl.u32 %v648, 7
        %v650 = vsub.s32 %v647, %v649
        %v651 = vrot.slane %v643, %v650
        %v653 = vunpack.c.l.s4 1966171168
        %v654 = vunpack.c.0.s8 %v653
        %v655 = vlaneseq
        %v656 = vshrl.u32 %v655, 7
        %v657 = vsub.s32 %v654, %v656
        %v658 = vrot.slane %v644, %v657
        %v659 = vcombine.high %v651, %v651
        %v660 = vcombine.high %v658, %v658
        %v661 = vlaneseq
        %v662 = vshrl.u32 %v661, 7
        %v663 = vsub.s32 0, %v662
        %v664 = vrot.slane %v651, %v663
        %v665 = vlaneseq
        %v666 = vshrl.u32 %v665, 7
        %v667 = vsub.s32 0, %v666
        %v668 = vrot.slane %v658, %v667
        %v669 = vlaneseq
        %v670 = vshrl.u32 %v669, 7
        %v671 = vsub.s32 0, %v670
        %v672 = vrot.slane %v659, %v671
        %v673 = vlaneseq
        %v674 = vshrl.u32 %v673, 7
        %v675 = vsub.s32 0, %v674
        %v676 = vrot.slane %v660, %v675
        %v681 = vmul.f32 %v664, %v634
        %v682 = vmul.f32 %v664, %v635
        %v683 = vmul.f32 %v668, %v634
        %v684 = vmul.f32 %v668, %v635
        %v685 = vmul.f32 %v672, %v634
        %v686 = vmul.f32 %v672, %v635
        %v687 = vmul.f32 %v676, %v634
        %v688 = vmul.f32 %v676, %v635
        %v689 = vadd.f32 %v623, %v681
        %v690 = vadd.f32 %v624, %v682
        %v691 = vadd.f32 %v625, %v683
        %v692 = vadd.f32 %v626, %v684
        %v693 = vadd.f32 %v627, %v685
        %v694 = vadd.f32 %v628, %v686
        %v695 = vadd.f32 %v629, %v687
        %v696 = vadd.f32 %v630, %v688
        %s697 = scalar_lea.vmem %s200, 28 [#allocation2]
        %v698 = vld [vmem:[%s697] sm:$0xf]
        %s699 = scalar_lea.vmem %s209, 112 [#allocation5]
        %v700 = vld [vmem:[%s699] sm:$0xff]
        %v701 = vld [vmem:[%s699 + $0x8] sm:$0xff]
        %v704 = vunpack.c.l.s4 1966171168
        %v705 = vunpack.c.0.s8 %v704
        %v706 = vlaneseq
        %v707 = vshrl.u32 %v706, 7
        %v708 = vsub.s32 %v705, %v707
        %v709 = vrot.slane %v698, %v708
        %v710 = vcombine.high %v709, %v709
        %v712 = vunpack.c.l.s4 1966171168
        %v713 = vunpack.c.0.s8 %v712
        %v714 = vlaneseq
        %v715 = vshrl.u32 %v714, 7
        %v716 = vsub.s32 %v713, %v715
        %v717 = vrot.slane %v709, %v716
        %v719 = vunpack.c.l.s4 1966171168
        %v720 = vunpack.c.0.s8 %v719
        %v721 = vlaneseq
        %v722 = vshrl.u32 %v721, 7
        %v723 = vsub.s32 %v720, %v722
        %v724 = vrot.slane %v710, %v723
        %v725 = vcombine.high %v717, %v717
        %v726 = vcombine.high %v724, %v724
        %v727 = vlaneseq
        %v728 = vshrl.u32 %v727, 7
        %v729 = vsub.s32 0, %v728
        %v730 = vrot.slane %v717, %v729
        %v731 = vlaneseq
        %v732 = vshrl.u32 %v731, 7
        %v733 = vsub.s32 0, %v732
        %v734 = vrot.slane %v724, %v733
        %v735 = vlaneseq
        %v736 = vshrl.u32 %v735, 7
        %v737 = vsub.s32 0, %v736
        %v738 = vrot.slane %v725, %v737
        %v739 = vlaneseq
        %v740 = vshrl.u32 %v739, 7
        %v741 = vsub.s32 0, %v740
        %v742 = vrot.slane %v726, %v741
        %v747 = vmul.f32 %v730, %v700
        %v748 = vmul.f32 %v730, %v701
        %v749 = vmul.f32 %v734, %v700
        %v750 = vmul.f32 %v734, %v701
        %v751 = vmul.f32 %v738, %v700
        %v752 = vmul.f32 %v738, %v701
        %v753 = vmul.f32 %v742, %v700
        %v754 = vmul.f32 %v742, %v701
        %v755 = vadd.f32 %v689, %v747
        %v756 = vadd.f32 %v690, %v748
        %v757 = vadd.f32 %v691, %v749
        %v758 = vadd.f32 %v692, %v750
        %v759 = vadd.f32 %v693, %v751
        %v760 = vadd.f32 %v694, %v752
        %v761 = vadd.f32 %v695, %v753
        %v762 = vadd.f32 %v696, %v754
        %s763 = scalar_lea.vmem %s200, 32 [#allocation2]
        %v764 = vld [vmem:[%s763] sm:$0xf]
        %s765 = scalar_lea.vmem %s209, 128 [#allocation5]
        %v766 = vld [vmem:[%s765] sm:$0xff]
        %v767 = vld [vmem:[%s765 + $0x8] sm:$0xff]
        %v770 = vunpack.c.l.s4 1966171168
        %v771 = vunpack.c.0.s8 %v770
        %v772 = vlaneseq
        %v773 = vshrl.u32 %v772, 7
        %v774 = vsub.s32 %v771, %v773
        %v775 = vrot.slane %v764, %v774
        %v776 = vcombine.high %v775, %v775
        %v778 = vunpack.c.l.s4 1966171168
        %v779 = vunpack.c.0.s8 %v778
        %v780 = vlaneseq
        %v781 = vshrl.u32 %v780, 7
        %v782 = vsub.s32 %v779, %v781
        %v783 = vrot.slane %v775, %v782
        %v785 = vunpack.c.l.s4 1966171168
        %v786 = vunpack.c.0.s8 %v785
        %v787 = vlaneseq
        %v788 = vshrl.u32 %v787, 7
        %v789 = vsub.s32 %v786, %v788
        %v790 = vrot.slane %v776, %v789
        %v791 = vcombine.high %v783, %v783
        %v792 = vcombine.high %v790, %v790
        %v793 = vlaneseq
        %v794 = vshrl.u32 %v793, 7
        %v795 = vsub.s32 0, %v794
        %v796 = vrot.slane %v783, %v795
        %v797 = vlaneseq
        %v798 = vshrl.u32 %v797, 7
        %v799 = vsub.s32 0, %v798
        %v800 = vrot.slane %v790, %v799
        %v801 = vlaneseq
        %v802 = vshrl.u32 %v801, 7
        %v803 = vsub.s32 0, %v802
        %v804 = vrot.slane %v791, %v803
        %v805 = vlaneseq
        %v806 = vshrl.u32 %v805, 7
        %v807 = vsub.s32 0, %v806
        %v808 = vrot.slane %v792, %v807
        %v813 = vmul.f32 %v796, %v766
        %v814 = vmul.f32 %v796, %v767
        %v815 = vmul.f32 %v800, %v766
        %v816 = vmul.f32 %v800, %v767
        %v817 = vmul.f32 %v804, %v766
        %v818 = vmul.f32 %v804, %v767
        %v819 = vmul.f32 %v808, %v766
        %v820 = vmul.f32 %v808, %v767
        %v821 = vadd.f32 %v755, %v813
        %v822 = vadd.f32 %v756, %v814
        %v823 = vadd.f32 %v757, %v815
        %v824 = vadd.f32 %v758, %v816
        %v825 = vadd.f32 %v759, %v817
        %v826 = vadd.f32 %v760, %v818
        %v827 = vadd.f32 %v761, %v819
        %v828 = vadd.f32 %v762, %v820
        %s829 = scalar_lea.vmem %s200, 36 [#allocation2]
        %v830 = vld [vmem:[%s829] sm:$0xf]
        %s831 = scalar_lea.vmem %s209, 144 [#allocation5]
        %v832 = vld [vmem:[%s831] sm:$0xff]
        %v833 = vld [vmem:[%s831 + $0x8] sm:$0xff]
        %v836 = vunpack.c.l.s4 1966171168
        %v837 = vunpack.c.0.s8 %v836
        %v838 = vlaneseq
        %v839 = vshrl.u32 %v838, 7
        %v840 = vsub.s32 %v837, %v839
        %v841 = vrot.slane %v830, %v840
        %v842 = vcombine.high %v841, %v841
        %v844 = vunpack.c.l.s4 1966171168
        %v845 = vunpack.c.0.s8 %v844
        %v846 = vlaneseq
        %v847 = vshrl.u32 %v846, 7
        %v848 = vsub.s32 %v845, %v847
        %v849 = vrot.slane %v841, %v848
        %v851 = vunpack.c.l.s4 1966171168
        %v852 = vunpack.c.0.s8 %v851
        %v853 = vlaneseq
        %v854 = vshrl.u32 %v853, 7
        %v855 = vsub.s32 %v852, %v854
        %v856 = vrot.slane %v842, %v855
        %v857 = vcombine.high %v849, %v849
        %v858 = vcombine.high %v856, %v856
        %v859 = vlaneseq
        %v860 = vshrl.u32 %v859, 7
        %v861 = vsub.s32 0, %v860
        %v862 = vrot.slane %v849, %v861
        %v863 = vlaneseq
        %v864 = vshrl.u32 %v863, 7
        %v865 = vsub.s32 0, %v864
        %v866 = vrot.slane %v856, %v865
        %v867 = vlaneseq
        %v868 = vshrl.u32 %v867, 7
        %v869 = vsub.s32 0, %v868
        %v870 = vrot.slane %v857, %v869
        %v871 = vlaneseq
        %v872 = vshrl.u32 %v871, 7
        %v873 = vsub.s32 0, %v872
        %v874 = vrot.slane %v858, %v873
        %v879 = vmul.f32 %v862, %v832
        %v880 = vmul.f32 %v862, %v833
        %v881 = vmul.f32 %v866, %v832
        %v882 = vmul.f32 %v866, %v833
        %v883 = vmul.f32 %v870, %v832
        %v884 = vmul.f32 %v870, %v833
        %v885 = vmul.f32 %v874, %v832
        %v886 = vmul.f32 %v874, %v833
        %v887 = vadd.f32 %v821, %v879
        %v888 = vadd.f32 %v822, %v880
        %v889 = vadd.f32 %v823, %v881
        %v890 = vadd.f32 %v824, %v882
        %v891 = vadd.f32 %v825, %v883
        %v892 = vadd.f32 %v826, %v884
        %v893 = vadd.f32 %v827, %v885
        %v894 = vadd.f32 %v828, %v886
        %s895 = scalar_lea.vmem %s200, 40 [#allocation2]
        %v896 = vld [vmem:[%s895] sm:$0xf]
        %s897 = scalar_lea.vmem %s209, 160 [#allocation5]
        %v898 = vld [vmem:[%s897] sm:$0xff]
        %v899 = vld [vmem:[%s897 + $0x8] sm:$0xff]
        %v902 = vunpack.c.l.s4 1966171168
        %v903 = vunpack.c.0.s8 %v902
        %v904 = vlaneseq
        %v905 = vshrl.u32 %v904, 7
        %v906 = vsub.s32 %v903, %v905
        %v907 = vrot.slane %v896, %v906
        %v908 = vcombine.high %v907, %v907
        %v910 = vunpack.c.l.s4 1966171168
        %v911 = vunpack.c.0.s8 %v910
        %v912 = vlaneseq
        %v913 = vshrl.u32 %v912, 7
        %v914 = vsub.s32 %v911, %v913
        %v915 = vrot.slane %v907, %v914
        %v917 = vunpack.c.l.s4 1966171168
        %v918 = vunpack.c.0.s8 %v917
        %v919 = vlaneseq
        %v920 = vshrl.u32 %v919, 7
        %v921 = vsub.s32 %v918, %v920
        %v922 = vrot.slane %v908, %v921
        %v923 = vcombine.high %v915, %v915
        %v924 = vcombine.high %v922, %v922
        %v925 = vlaneseq
        %v926 = vshrl.u32 %v925, 7
        %v927 = vsub.s32 0, %v926
        %v928 = vrot.slane %v915, %v927
        %v929 = vlaneseq
        %v930 = vshrl.u32 %v929, 7
        %v931 = vsub.s32 0, %v930
        %v932 = vrot.slane %v922, %v931
        %v933 = vlaneseq
        %v934 = vshrl.u32 %v933, 7
        %v935 = vsub.s32 0, %v934
        %v936 = vrot.slane %v923, %v935
        %v937 = vlaneseq
        %v938 = vshrl.u32 %v937, 7
        %v939 = vsub.s32 0, %v938
        %v940 = vrot.slane %v924, %v939
        %v945 = vmul.f32 %v928, %v898
        %v946 = vmul.f32 %v928, %v899
        %v947 = vmul.f32 %v932, %v898
        %v948 = vmul.f32 %v932, %v899
        %v949 = vmul.f32 %v936, %v898
        %v950 = vmul.f32 %v936, %v899
        %v951 = vmul.f32 %v940, %v898
        %v952 = vmul.f32 %v940, %v899
        %v953 = vadd.f32 %v887, %v945
        %v954 = vadd.f32 %v888, %v946
        %v955 = vadd.f32 %v889, %v947
        %v956 = vadd.f32 %v890, %v948
        %v957 = vadd.f32 %v891, %v949
        %v958 = vadd.f32 %v892, %v950
        %v959 = vadd.f32 %v893, %v951
        %v960 = vadd.f32 %v894, %v952
        %s961 = scalar_lea.vmem %s200, 44 [#allocation2]
        %v962 = vld [vmem:[%s961] sm:$0xf]
        %s963 = scalar_lea.vmem %s209, 176 [#allocation5]
        %v964 = vld [vmem:[%s963] sm:$0xff]
        %v965 = vld [vmem:[%s963 + $0x8] sm:$0xff]
        %v968 = vunpack.c.l.s4 1966171168
        %v969 = vunpack.c.0.s8 %v968
        %v970 = vlaneseq
        %v971 = vshrl.u32 %v970, 7
        %v972 = vsub.s32 %v969, %v971
        %v973 = vrot.slane %v962, %v972
        %v974 = vcombine.high %v973, %v973
        %v976 = vunpack.c.l.s4 1966171168
        %v977 = vunpack.c.0.s8 %v976
        %v978 = vlaneseq
        %v979 = vshrl.u32 %v978, 7
        %v980 = vsub.s32 %v977, %v979
        %v981 = vrot.slane %v973, %v980
        %v983 = vunpack.c.l.s4 1966171168
        %v984 = vunpack.c.0.s8 %v983
        %v985 = vlaneseq
        %v986 = vshrl.u32 %v985, 7
        %v987 = vsub.s32 %v984, %v986
        %v988 = vrot.slane %v974, %v987
        %v989 = vcombine.high %v981, %v981
        %v990 = vcombine.high %v988, %v988
        %v991 = vlaneseq
        %v992 = vshrl.u32 %v991, 7
        %v993 = vsub.s32 0, %v992
        %v994 = vrot.slane %v981, %v993
        %v995 = vlaneseq
        %v996 = vshrl.u32 %v995, 7
        %v997 = vsub.s32 0, %v996
        %v998 = vrot.slane %v988, %v997
        %v999 = vlaneseq
        %v1000 = vshrl.u32 %v999, 7
        %v1001 = vsub.s32 0, %v1000
        %v1002 = vrot.slane %v989, %v1001
        %v1003 = vlaneseq
        %v1004 = vshrl.u32 %v1003, 7
        %v1005 = vsub.s32 0, %v1004
        %v1006 = vrot.slane %v990, %v1005
        %v1011 = vmul.f32 %v994, %v964
        %v1012 = vmul.f32 %v994, %v965
        %v1013 = vmul.f32 %v998, %v964
        %v1014 = vmul.f32 %v998, %v965
        %v1015 = vmul.f32 %v1002, %v964
        %v1016 = vmul.f32 %v1002, %v965
        %v1017 = vmul.f32 %v1006, %v964
        %v1018 = vmul.f32 %v1006, %v965
        %v1019 = vadd.f32 %v953, %v1011
        %v1020 = vadd.f32 %v954, %v1012
        %v1021 = vadd.f32 %v955, %v1013
        %v1022 = vadd.f32 %v956, %v1014
        %v1023 = vadd.f32 %v957, %v1015
        %v1024 = vadd.f32 %v958, %v1016
        %v1025 = vadd.f32 %v959, %v1017
        %v1026 = vadd.f32 %v960, %v1018
        %s1027 = scalar_lea.vmem %s200, 48 [#allocation2]
        %v1028 = vld [vmem:[%s1027] sm:$0xf]
        %s1029 = scalar_lea.vmem %s209, 192 [#allocation5]
        %v1030 = vld [vmem:[%s1029] sm:$0xff]
        %v1031 = vld [vmem:[%s1029 + $0x8] sm:$0xff]
        %v1034 = vunpack.c.l.s4 1966171168
        %v1035 = vunpack.c.0.s8 %v1034
        %v1036 = vlaneseq
        %v1037 = vshrl.u32 %v1036, 7
        %v1038 = vsub.s32 %v1035, %v1037
        %v1039 = vrot.slane %v1028, %v1038
        %v1040 = vcombine.high %v1039, %v1039
        %v1042 = vunpack.c.l.s4 1966171168
        %v1043 = vunpack.c.0.s8 %v1042
        %v1044 = vlaneseq
        %v1045 = vshrl.u32 %v1044, 7
        %v1046 = vsub.s32 %v1043, %v1045
        %v1047 = vrot.slane %v1039, %v1046
        %v1049 = vunpack.c.l.s4 1966171168
        %v1050 = vunpack.c.0.s8 %v1049
        %v1051 = vlaneseq
        %v1052 = vshrl.u32 %v1051, 7
        %v1053 = vsub.s32 %v1050, %v1052
        %v1054 = vrot.slane %v1040, %v1053
        %v1055 = vcombine.high %v1047, %v1047
        %v1056 = vcombine.high %v1054, %v1054
        %v1057 = vlaneseq
        %v1058 = vshrl.u32 %v1057, 7
        %v1059 = vsub.s32 0, %v1058
        %v1060 = vrot.slane %v1047, %v1059
        %v1061 = vlaneseq
        %v1062 = vshrl.u32 %v1061, 7
        %v1063 = vsub.s32 0, %v1062
        %v1064 = vrot.slane %v1054, %v1063
        %v1065 = vlaneseq
        %v1066 = vshrl.u32 %v1065, 7
        %v1067 = vsub.s32 0, %v1066
        %v1068 = vrot.slane %v1055, %v1067
        %v1069 = vlaneseq
        %v1070 = vshrl.u32 %v1069, 7
        %v1071 = vsub.s32 0, %v1070
        %v1072 = vrot.slane %v1056, %v1071
        %v1077 = vmul.f32 %v1060, %v1030
        %v1078 = vmul.f32 %v1060, %v1031
        %v1079 = vmul.f32 %v1064, %v1030
        %v1080 = vmul.f32 %v1064, %v1031
        %v1081 = vmul.f32 %v1068, %v1030
        %v1082 = vmul.f32 %v1068, %v1031
        %v1083 = vmul.f32 %v1072, %v1030
        %v1084 = vmul.f32 %v1072, %v1031
        %v1085 = vadd.f32 %v1019, %v1077
        %v1086 = vadd.f32 %v1020, %v1078
        %v1087 = vadd.f32 %v1021, %v1079
        %v1088 = vadd.f32 %v1022, %v1080
        %v1089 = vadd.f32 %v1023, %v1081
        %v1090 = vadd.f32 %v1024, %v1082
        %v1091 = vadd.f32 %v1025, %v1083
        %v1092 = vadd.f32 %v1026, %v1084
        %s1093 = scalar_lea.vmem %s200, 52 [#allocation2]
        %v1094 = vld [vmem:[%s1093] sm:$0xf]
        %s1095 = scalar_lea.vmem %s209, 208 [#allocation5]
        %v1096 = vld [vmem:[%s1095] sm:$0xff]
        %v1097 = vld [vmem:[%s1095 + $0x8] sm:$0xff]
        %v1100 = vunpack.c.l.s4 1966171168
        %v1101 = vunpack.c.0.s8 %v1100
        %v1102 = vlaneseq
        %v1103 = vshrl.u32 %v1102, 7
        %v1104 = vsub.s32 %v1101, %v1103
        %v1105 = vrot.slane %v1094, %v1104
        %v1106 = vcombine.high %v1105, %v1105
        %v1108 = vunpack.c.l.s4 1966171168
        %v1109 = vunpack.c.0.s8 %v1108
        %v1110 = vlaneseq
        %v1111 = vshrl.u32 %v1110, 7
        %v1112 = vsub.s32 %v1109, %v1111
        %v1113 = vrot.slane %v1105, %v1112
        %v1115 = vunpack.c.l.s4 1966171168
        %v1116 = vunpack.c.0.s8 %v1115
        %v1117 = vlaneseq
        %v1118 = vshrl.u32 %v1117, 7
        %v1119 = vsub.s32 %v1116, %v1118
        %v1120 = vrot.slane %v1106, %v1119
        %v1121 = vcombine.high %v1113, %v1113
        %v1122 = vcombine.high %v1120, %v1120
        %v1123 = vlaneseq
        %v1124 = vshrl.u32 %v1123, 7
        %v1125 = vsub.s32 0, %v1124
        %v1126 = vrot.slane %v1113, %v1125
        %v1127 = vlaneseq
        %v1128 = vshrl.u32 %v1127, 7
        %v1129 = vsub.s32 0, %v1128
        %v1130 = vrot.slane %v1120, %v1129
        %v1131 = vlaneseq
        %v1132 = vshrl.u32 %v1131, 7
        %v1133 = vsub.s32 0, %v1132
        %v1134 = vrot.slane %v1121, %v1133
        %v1135 = vlaneseq
        %v1136 = vshrl.u32 %v1135, 7
        %v1137 = vsub.s32 0, %v1136
        %v1138 = vrot.slane %v1122, %v1137
        %v1143 = vmul.f32 %v1126, %v1096
        %v1144 = vmul.f32 %v1126, %v1097
        %v1145 = vmul.f32 %v1130, %v1096
        %v1146 = vmul.f32 %v1130, %v1097
        %v1147 = vmul.f32 %v1134, %v1096
        %v1148 = vmul.f32 %v1134, %v1097
        %v1149 = vmul.f32 %v1138, %v1096
        %v1150 = vmul.f32 %v1138, %v1097
        %v1151 = vadd.f32 %v1085, %v1143
        %v1152 = vadd.f32 %v1086, %v1144
        %v1153 = vadd.f32 %v1087, %v1145
        %v1154 = vadd.f32 %v1088, %v1146
        %v1155 = vadd.f32 %v1089, %v1147
        %v1156 = vadd.f32 %v1090, %v1148
        %v1157 = vadd.f32 %v1091, %v1149
        %v1158 = vadd.f32 %v1092, %v1150
        %s1159 = scalar_lea.vmem %s200, 56 [#allocation2]
        %v1160 = vld [vmem:[%s1159] sm:$0xf]
        %s1161 = scalar_lea.vmem %s209, 224 [#allocation5]
        %v1162 = vld [vmem:[%s1161] sm:$0xff]
        %v1163 = vld [vmem:[%s1161 + $0x8] sm:$0xff]
        %v1166 = vunpack.c.l.s4 1966171168
        %v1167 = vunpack.c.0.s8 %v1166
        %v1168 = vlaneseq
        %v1169 = vshrl.u32 %v1168, 7
        %v1170 = vsub.s32 %v1167, %v1169
        %v1171 = vrot.slane %v1160, %v1170
        %v1172 = vcombine.high %v1171, %v1171
        %v1174 = vunpack.c.l.s4 1966171168
        %v1175 = vunpack.c.0.s8 %v1174
        %v1176 = vlaneseq
        %v1177 = vshrl.u32 %v1176, 7
        %v1178 = vsub.s32 %v1175, %v1177
        %v1179 = vrot.slane %v1171, %v1178
        %v1181 = vunpack.c.l.s4 1966171168
        %v1182 = vunpack.c.0.s8 %v1181
        %v1183 = vlaneseq
        %v1184 = vshrl.u32 %v1183, 7
        %v1185 = vsub.s32 %v1182, %v1184
        %v1186 = vrot.slane %v1172, %v1185
        %v1187 = vcombine.high %v1179, %v1179
        %v1188 = vcombine.high %v1186, %v1186
        %v1189 = vlaneseq
        %v1190 = vshrl.u32 %v1189, 7
        %v1191 = vsub.s32 0, %v1190
        %v1192 = vrot.slane %v1179, %v1191
        %v1193 = vlaneseq
        %v1194 = vshrl.u32 %v1193, 7
        %v1195 = vsub.s32 0, %v1194
        %v1196 = vrot.slane %v1186, %v1195
        %v1197 = vlaneseq
        %v1198 = vshrl.u32 %v1197, 7
        %v1199 = vsub.s32 0, %v1198
        %v1200 = vrot.slane %v1187, %v1199
        %v1201 = vlaneseq
        %v1202 = vshrl.u32 %v1201, 7
        %v1203 = vsub.s32 0, %v1202
        %v1204 = vrot.slane %v1188, %v1203
        %v1209 = vmul.f32 %v1192, %v1162
        %v1210 = vmul.f32 %v1192, %v1163
        %v1211 = vmul.f32 %v1196, %v1162
        %v1212 = vmul.f32 %v1196, %v1163
        %v1213 = vmul.f32 %v1200, %v1162
        %v1214 = vmul.f32 %v1200, %v1163
        %v1215 = vmul.f32 %v1204, %v1162
        %v1216 = vmul.f32 %v1204, %v1163
        %v1217 = vadd.f32 %v1151, %v1209
        %v1218 = vadd.f32 %v1152, %v1210
        %v1219 = vadd.f32 %v1153, %v1211
        %v1220 = vadd.f32 %v1154, %v1212
        %v1221 = vadd.f32 %v1155, %v1213
        %v1222 = vadd.f32 %v1156, %v1214
        %v1223 = vadd.f32 %v1157, %v1215
        %v1224 = vadd.f32 %v1158, %v1216
        %s1225 = scalar_lea.vmem %s200, 60 [#allocation2]
        %v1226 = vld [vmem:[%s1225] sm:$0xf]
        %s1227 = scalar_lea.vmem %s209, 240 [#allocation5]
        %v1228 = vld [vmem:[%s1227] sm:$0xff]
        %v1229 = vld [vmem:[%s1227 + $0x8] sm:$0xff]
        %v1232 = vunpack.c.l.s4 1966171168
        %v1233 = vunpack.c.0.s8 %v1232
        %v1234 = vlaneseq
        %v1235 = vshrl.u32 %v1234, 7
        %v1236 = vsub.s32 %v1233, %v1235
        %v1237 = vrot.slane %v1226, %v1236
        %v1238 = vcombine.high %v1237, %v1237
        %v1240 = vunpack.c.l.s4 1966171168
        %v1241 = vunpack.c.0.s8 %v1240
        %v1242 = vlaneseq
        %v1243 = vshrl.u32 %v1242, 7
        %v1244 = vsub.s32 %v1241, %v1243
        %v1245 = vrot.slane %v1237, %v1244
        %v1247 = vunpack.c.l.s4 1966171168
        %v1248 = vunpack.c.0.s8 %v1247
        %v1249 = vlaneseq
        %v1250 = vshrl.u32 %v1249, 7
        %v1251 = vsub.s32 %v1248, %v1250
        %v1252 = vrot.slane %v1238, %v1251
        %v1253 = vcombine.high %v1245, %v1245
        %v1254 = vcombine.high %v1252, %v1252
        %v1255 = vlaneseq
        %v1256 = vshrl.u32 %v1255, 7
        %v1257 = vsub.s32 0, %v1256
        %v1258 = vrot.slane %v1245, %v1257
        %v1259 = vlaneseq
        %v1260 = vshrl.u32 %v1259, 7
        %v1261 = vsub.s32 0, %v1260
        %v1262 = vrot.slane %v1252, %v1261
        %v1263 = vlaneseq
        %v1264 = vshrl.u32 %v1263, 7
        %v1265 = vsub.s32 0, %v1264
        %v1266 = vrot.slane %v1253, %v1265
        %v1267 = vlaneseq
        %v1268 = vshrl.u32 %v1267, 7
        %v1269 = vsub.s32 0, %v1268
        %v1270 = vrot.slane %v1254, %v1269
        %v1275 = vmul.f32 %v1258, %v1228
        %v1276 = vmul.f32 %v1258, %v1229
        %v1277 = vmul.f32 %v1262, %v1228
        %v1278 = vmul.f32 %v1262, %v1229
        %v1279 = vmul.f32 %v1266, %v1228
        %v1280 = vmul.f32 %v1266, %v1229
        %v1281 = vmul.f32 %v1270, %v1228
        %v1282 = vmul.f32 %v1270, %v1229
        %v1283 = vadd.f32 %v1217, %v1275
        %v1284 = vadd.f32 %v1218, %v1276
        %v1285 = vadd.f32 %v1219, %v1277
        %v1286 = vadd.f32 %v1220, %v1278
        %v1287 = vadd.f32 %v1221, %v1279
        %v1288 = vadd.f32 %v1222, %v1280
        %v1289 = vadd.f32 %v1223, %v1281
        %v1290 = vadd.f32 %v1224, %v1282
        %vm1291 = vcmask 130048
        %1292 = vst.msk [vmem:[%s234] sm:$0xff] %vm1291, %v1283
        %1293 = vst.msk [vmem:[%s234 + $0x8] sm:$0xff] %vm1291, %v1284
        %1294 = vst.msk [vmem:[%s234 + $0x10] sm:$0xff] %vm1291, %v1285
        %1295 = vst.msk [vmem:[%s234 + $0x18] sm:$0xff] %vm1291, %v1286
        %1296 = vst.msk [vmem:[%s234 + $0x20] sm:$0xff] %vm1291, %v1287
        %1297 = vst.msk [vmem:[%s234 + $0x28] sm:$0xff] %vm1291, %v1288
        %1298 = vst.msk [vmem:[%s234 + $0x30] sm:$0xff] %vm1291, %v1289
        %1299 = vst.msk [vmem:[%s234 + $0x38] sm:$0xff] %vm1291, %v1290
        %s1300 = sand.u32 %s111, 1
        %s1301 = scalar_lea.sflag [#allocation4], %s1300
        %s1302 = sand.u32 %s111, 1
        %s1303 = smul.addr %s1302, 64
        %s1304 = scalar_lea.vmem [#allocation7], %s1303
        // Predicated region
        $region37: #{tpu_custom_call.1} parent=27 // pred_check
          %p1305 = pneg %p121
        $region38: #{tpu_custom_call.1} parent=27 // pred_check_branch
          %1307 = sbr.rel (%p1305) target = $region40
        $region39: #{tpu_custom_call.1} parent=27 // pred_region
          %s1308 = smul.u32 2, %s29
          %s1310 = ssub.s32 1024, 1024
          %1311 = vsyncadd %s1301, %s1310
          %s1312 = sadd.s32 %s28, %s1308
          %s1313 = smul.addr %s27, 8
          %s1314 = sadd.s32 %s1312, %s1313
          %s1315 = smul.addr %s1314, 128
          %s1316 = scalar_lea.hbm %s2, %s1315
          %s1317 = sshll.u32 %s1304, 4
          %s1318 = int_to_ptr.vmem [resolvable:$true] %s1317
          %1323 = dma.vmem_to_hbm [thread:$0]  %s1318, 1024, %s1316, %s1301, 128, 128, 8
        $region40: #{tpu_custom_call.1} parent=27 // pred_fallthru
          _
      $region28: #{tpu_custom_call.1} parent=5 // pred_fallthru
        _
      %p1324 = scmp.le.s32.totalorder 2, %s17
      // Predicated region
      $region41: #{tpu_custom_call.1} parent=5 // pred_check
        %p1325 = pneg %p1324
      $region42: #{tpu_custom_call.1} parent=5 // pred_check_branch
        %1327 = sbr.rel (%p1325) target = $region44
      $region43: #{tpu_custom_call.1} parent=5 // pred_region
        %s1328 = ssub.s32 %s17, 2
        // Predicated region
        $region45: #{tpu_custom_call.1} parent=43 // pred_check
          %p1329 = pneg %p127
        $region46: #{tpu_custom_call.1} parent=43 // pred_check_branch
          %1331 = sbr.rel (%p1329) target = $region48
        $region47: #{tpu_custom_call.1} parent=43 // pred_region
          %s1332 = sand.u32 %s112, 1
          %s1333 = scalar_lea.sflag [#allocation4], %s1332
          %s1334 = sand.u32 %s112, 1
          %s1335 = smul.addr %s1334, 64
          %s1336 = scalar_lea.vmem [#allocation7], %s1335
          %1337 = dma.done %s1333, 1024
        $region48: #{tpu_custom_call.1} parent=43 // pred_fallthru
          _
      $region44: #{tpu_custom_call.1} parent=5 // pred_fallthru
        _
    $region6: #{tpu_custom_call.1} parent=1 // loop_footer
      %s21 = sadd.s32 1, %s17
    $region7: #{tpu_custom_call.1} parent=1 // loop_footer_branch
      %16 = sbr.rel target = $region3
    $region8: #{tpu_custom_call.1} parent=1 // loop_exit
      _
    %1338 = vsyncpa [#allocation3], 1
    %s1339 = scalar_lea.sflag [#allocation3], 1
    %1340 = vsyncpa %s1339, 1
    %1341 = vsyncpa [#allocation6], 1
    %s1342 = scalar_lea.sflag [#allocation6], 1
    %1343 = vsyncpa %s1342, 1
    %1344 = vsyncpa [#allocation4], 1
    %s1345 = scalar_lea.sflag [#allocation4], 1
    %1346 = vsyncpa %s1345, 1

</llo_original>
